<compile_context>
chip_gen: v7x
topology: tpu7x:2x2x1
jax: 0.10.0
libtpu: 0.0.40
codegen_flags: <defaults>
</compile_context>

<pallas_src>
import jax
import jax.numpy as jnp
from jax.experimental import pallas as pl
from jax.experimental.pallas import tpu as pltpu

BN_EPS = 1e-5  # PyTorch BatchNorm1d default


def _round_up(x, m):
    return ((x + m - 1) // m) * m


# ----------------------------------------------------------------------------
# Kernel
# ----------------------------------------------------------------------------
def _mlp_kernel(src_ref, tgt_ref, edge_ref,
                w1a_ref, w1b_ref, w1c_ref, b1_ref,
                w2_ref, b2_ref,
                w3_ref, b3_ref,
                o_ref):
    bf16 = jnp.bfloat16

    # --- Layer 1: Linear over the 3 input chunks (no concat) -> ReLU -------------
    h = (jnp.dot(src_ref[...].astype(bf16), w1a_ref[...],
                 preferred_element_type=jnp.float32)
         + jnp.dot(tgt_ref[...].astype(bf16), w1b_ref[...],
                   preferred_element_type=jnp.float32)
         + jnp.dot(edge_ref[...].astype(bf16), w1c_ref[...],
                   preferred_element_type=jnp.float32)
         + b1_ref[...])
    h = jnp.maximum(h, 0.0)
    # BatchNorm1 (eval) folded into w2/b2; Dropout = identity in eval mode.

    # --- Layer 2: Linear -> ReLU (BatchNorm2 folded into w3/b3) -------------------
    h = jnp.dot(h.astype(bf16), w2_ref[...],
                preferred_element_type=jnp.float32) + b2_ref[...]
    h = jnp.maximum(h, 0.0)

    # --- Head: Linear(H2, 1) as VPU multiply + lane reduce ------------------------
    # Relayout the (tile_b, 1) column into a lane-dense (tile_b//128, 128) slab
    # BEFORE the bias/sigmoid/store: EUP + stores then run on dense vregs
    # (unmasked vst) instead of 1-useful-lane-per-vreg masked stores.
    z = jnp.sum(h * w3_ref[...], axis=-1, keepdims=True)      # (tile_b, 1)
    z = z.reshape(o_ref.shape)                                 # (tile_b//128, 128)
    o_ref[...] = jax.nn.sigmoid(z + b3_ref[...])


# ----------------------------------------------------------------------------
# Parameters
# ----------------------------------------------------------------------------
def make_params(key, node_embedding_dim, edge_feature_dim, hidden_dims=(128, 64)):
    """Deterministic raw parameter init (shapes match the PyTorch module)."""
    input_dim = 2 * node_embedding_dim + edge_feature_dim
    dims = [input_dim] + list(hidden_dims) + [1]
    params = {}
    for i, (din, dout) in enumerate(zip(dims[:-1], dims[1:])):
        key, kw, kb = jax.random.split(key, 3)
        bound = 1.0 / jnp.sqrt(float(din))
        params[f"w{i + 1}"] = jax.random.uniform(kw, (din, dout), jnp.float32, -bound, bound)
        params[f"b{i + 1}"] = jax.random.uniform(kb, (1, dout), jnp.float32, -bound, bound)
    for i, h in enumerate(hidden_dims):
        params[f"gamma{i + 1}"] = jnp.ones((1, h), jnp.float32)
        params[f"beta{i + 1}"] = jnp.zeros((1, h), jnp.float32)
        params[f"rmean{i + 1}"] = jnp.zeros((1, h), jnp.float32)
        params[f"rvar{i + 1}"] = jnp.ones((1, h), jnp.float32)
    return params


def fold_params(params, node_embedding_dim):
    """One-time prep: fold eval-mode BN into the following Linear; split w1; cast
    matmul operands to bf16 (f32 accumulation happens in the kernel)."""
    d = node_embedding_dim

    scale1 = params["gamma1"] * jax.lax.rsqrt(params["rvar1"] + BN_EPS)   # (1, H1)
    shift1 = params["beta1"] - params["rmean1"] * scale1                  # (1, H1)
    scale2 = params["gamma2"] * jax.lax.rsqrt(params["rvar2"] + BN_EPS)   # (1, H2)
    shift2 = params["beta2"] - params["rmean2"] * scale2                  # (1, H2)

    w1 = params["w1"]                                   # (input_dim, H1)
    w2f = params["w2"] * scale1.T                       # (H1, H2) row-scaled
    b2f = params["b2"] + shift1 @ params["w2"]          # (1, H2)
    w3f = params["w3"] * scale2.T                       # (H2, 1) row-scaled
    b3f = params["b3"] + shift2 @ params["w3"]          # (1, 1)

    return {
        "w1a": w1[:d].astype(jnp.bfloat16),             # (d, H1)
        "w1b": w1[d:2 * d].astype(jnp.bfloat16),        # (d, H1)
        "w1c": w1[2 * d:].astype(jnp.bfloat16),         # (edge_dim, H1)
        "b1": params["b1"],                             # (1, H1) f32
        "w2": w2f.astype(jnp.bfloat16),                 # (H1, H2)
        "b2": b2f,                                      # (1, H2) f32
        "w3": w3f.T,                                    # (1, H2) f32 row (VPU head)
        "b3": b3f,                                      # (1, 1)  f32
    }


# ----------------------------------------------------------------------------
# Wrapper
# ----------------------------------------------------------------------------
def enhanced_citation_mlp(source_embeddings, target_embeddings, edge_features,
                          kparams, tile_b_max=2048):
    src = source_embeddings.astype(jnp.float32)
    tgt = target_embeddings.astype(jnp.float32)
    edge = edge_features.astype(jnp.float32)
    batch = src.shape[0]

    # Batch tiling: single tile when the batch fits (block == full array);
    # otherwise tiles are multiples of 1024 (so the lane-dense out block keeps
    # its second-minor dim a multiple of 8) and shrink if a big tile would pad
    # the batch excessively (the kernel is HBM-bandwidth bound on its inputs).
    tile_b = min(tile_b_max, _round_up(batch, 256))
    if batch > tile_b:
        tile_b = max(1024, (tile_b // 1024) * 1024)
        while tile_b > 1024 and _round_up(batch, tile_b) - batch > max(batch // 8, 512):
            tile_b //= 2
    batch_p = _round_up(batch, tile_b)
    pad = batch_p - batch
    if pad:
        src = jnp.pad(src, ((0, pad), (0, 0)))
        tgt = jnp.pad(tgt, ((0, pad), (0, 0)))
        edge = jnp.pad(edge, ((0, pad), (0, 0)))

    d_src, d_tgt, d_edge = src.shape[1], tgt.shape[1], edge.shape[1]
    h1 = kparams["b1"].shape[1]
    h2 = kparams["b2"].shape[1]

    grid = (batch_p // tile_b,)
    out_rows = batch_p // 128          # lane-dense output: (out_rows, 128)
    tile_rows = tile_b // 128

    def resident(shape):
        # Weights/biases: single block, constant index map -> stays in VMEM.
        return pl.BlockSpec(shape, lambda i: (0, 0))

    in_specs = [
        pl.BlockSpec((tile_b, d_src), lambda i: (i, 0)),
        pl.BlockSpec((tile_b, d_tgt), lambda i: (i, 0)),
        pl.BlockSpec((tile_b, d_edge), lambda i: (i, 0)),
        resident((d_src, h1)),
        resident((d_tgt, h1)),
        resident((d_edge, h1)),
        resident((1, h1)),
        resident((h1, h2)),
        resident((1, h2)),
        resident((1, h2)),
        resident((1, 1)),
    ]
    out_specs = pl.BlockSpec((tile_rows, 128), lambda i: (i, 0))

    out = pl.pallas_call(
        _mlp_kernel,
        out_shape=jax.ShapeDtypeStruct((out_rows, 128), jnp.float32),
        grid=grid,
        in_specs=in_specs,
        out_specs=out_specs,
        compiler_params=pltpu.CompilerParams(
            dimension_semantics=("parallel",),   # shards batch tiles across TCs (v7x)
            vmem_limit_bytes=32 * 1024 * 1024,
        ),
    )(src, tgt, edge,
      kparams["w1a"], kparams["w1b"], kparams["w1c"], kparams["b1"],
      kparams["w2"], kparams["b2"], kparams["w3"], kparams["b3"])

    # Lane-dense (out_rows, 128) -> (batch, 1); row-major ordering matches the
    # in-kernel reshape, so element (r, c) is batch index 128*r + c.
    return out.reshape(batch_p, 1)[:batch]


# ----------------------------------------------------------------------------
# Pure-JAX reference (eval-mode PyTorch semantics)
# ----------------------------------------------------------------------------
def _reference(source_embeddings, target_embeddings, edge_features, params):
    x = jnp.concatenate([source_embeddings, target_embeddings, edge_features], axis=1)
    h = jnp.maximum(x @ params["w1"] + params["b1"], 0.0)
    h = (h - params["rmean1"]) / jnp.sqrt(params["rvar1"] + BN_EPS) * params["gamma1"] + params["beta1"]
    h = jnp.maximum(h @ params["w2"] + params["b2"], 0.0)
    h = (h - params["rmean2"]) / jnp.sqrt(params["rvar2"] + BN_EPS) * params["gamma2"] + params["beta2"]
    return jax.nn.sigmoid(h @ params["w3"] + params["b3"])


if __name__ == "__main__":
    node_embedding_dim = 32
    edge_feature_dim = 16
    batch = 8

    key = jax.random.PRNGKey(0)
    k_src, k_tgt, k_edge, k_par = jax.random.split(key, 4)
    source_embeddings = jax.random.normal(k_src, (batch, node_embedding_dim), jnp.float32)
    target_embeddings = jax.random.normal(k_tgt, (batch, node_embedding_dim), jnp.float32)
    edge_features = jax.random.normal(k_edge, (batch, edge_feature_dim), jnp.float32)

    params = make_params(k_par, node_embedding_dim, edge_feature_dim, hidden_dims=(128, 64))
    kparams = fold_params(params, node_embedding_dim)

    out = enhanced_citation_mlp(source_embeddings, target_embeddings, edge_features, kparams)
    out = jax.block_until_ready(out)

    ref = _reference(source_embeddings, target_embeddings, edge_features, params)
    assert out.shape == (batch, 1), out.shape
    # Tolerance relaxed vs f32 reference because matmul operands run in bf16 on the MXU.
    assert jnp.max(jnp.abs(out - ref)) < 2e-2, (out, ref)

    print("KERNEL_OK")
</pallas_src>

<mosaic_0001>
module attributes {stable_mosaic.version = 11 : i64} {
  func.func @_mlp_kernel(%arg0: i32, %arg1: memref<256x32xf32, #tpu.memory_space<vmem>>, %arg2: memref<256x32xf32, #tpu.memory_space<vmem>>, %arg3: memref<256x16xf32, #tpu.memory_space<vmem>>, %arg4: memref<32x128xbf16, #tpu.memory_space<vmem>>, %arg5: memref<32x128xbf16, #tpu.memory_space<vmem>>, %arg6: memref<16x128xbf16, #tpu.memory_space<vmem>>, %arg7: memref<1x128xf32, #tpu.memory_space<vmem>>, %arg8: memref<128x64xbf16, #tpu.memory_space<vmem>>, %arg9: memref<1x64xf32, #tpu.memory_space<vmem>>, %arg10: memref<1x64xf32, #tpu.memory_space<vmem>>, %arg11: memref<1x1xf32, #tpu.memory_space<vmem>>, %arg12: memref<2x128xf32, #tpu.memory_space<vmem>>) attributes {dimension_semantics = [#tpu.dimension_semantics<parallel>], iteration_bounds = array<i64: 1>, scalar_prefetch = 0 : i64, scratch_operands = 0 : i64, tpu.core_type = #tpu.core_type<tc>, window_params = [{transform_indices = @transform_0, window_bounds = array<i64: 256, 32>}, {transform_indices = @transform_1, window_bounds = array<i64: 256, 32>}, {transform_indices = @transform_2, window_bounds = array<i64: 256, 16>}, {pipeline_mode = #tpu.pipeline_mode<synchronous>, transform_indices = @transform_3, window_bounds = array<i64: 32, 128>}, {pipeline_mode = #tpu.pipeline_mode<synchronous>, transform_indices = @transform_4, window_bounds = array<i64: 32, 128>}, {pipeline_mode = #tpu.pipeline_mode<synchronous>, transform_indices = @transform_5, window_bounds = array<i64: 16, 128>}, {pipeline_mode = #tpu.pipeline_mode<synchronous>, transform_indices = @transform_6, window_bounds = array<i64: 1, 128>}, {pipeline_mode = #tpu.pipeline_mode<synchronous>, transform_indices = @transform_7, window_bounds = array<i64: 128, 64>}, {pipeline_mode = #tpu.pipeline_mode<synchronous>, transform_indices = @transform_8, window_bounds = array<i64: 1, 64>}, {pipeline_mode = #tpu.pipeline_mode<synchronous>, transform_indices = @transform_9, window_bounds = array<i64: 1, 64>}, {pipeline_mode = #tpu.pipeline_mode<synchronous>, transform_indices = @transform_10, window_bounds = array<i64: 1, 1>}, {transform_indices = @transform_11, window_bounds = array<i64: 2, 128>}]} {
    %c0 = arith.constant 0 : index
    %c0_0 = arith.constant 0 : index
    %0 = vector.load %arg1[%c0, %c0_0] : memref<256x32xf32, #tpu.memory_space<vmem>>, vector<256x32xf32>
    %1 = arith.truncf %0 : vector<256x32xf32> to vector<256x32xbf16>
    %c0_1 = arith.constant 0 : index
    %c0_2 = arith.constant 0 : index
    %2 = vector.load %arg4[%c0_1, %c0_2] : memref<32x128xbf16, #tpu.memory_space<vmem>>, vector<32x128xbf16>
    %cst = arith.constant dense<0.000000e+00> : vector<256x128xf32>
    %3 = tpu.matmul %1, %2, %cst {dimension_numbers = #tpu.dot_dimension_numbers<[1], [0], [0], [1], [0, 0, 1, 1], [], []>} : vector<256x32xbf16>, vector<32x128xbf16>, vector<256x128xf32> -> vector<256x128xf32>
    %c0_3 = arith.constant 0 : index
    %c0_4 = arith.constant 0 : index
    %4 = vector.load %arg2[%c0_3, %c0_4] : memref<256x32xf32, #tpu.memory_space<vmem>>, vector<256x32xf32>
    %5 = arith.truncf %4 : vector<256x32xf32> to vector<256x32xbf16>
    %c0_5 = arith.constant 0 : index
    %c0_6 = arith.constant 0 : index
    %6 = vector.load %arg5[%c0_5, %c0_6] : memref<32x128xbf16, #tpu.memory_space<vmem>>, vector<32x128xbf16>
    %cst_7 = arith.constant dense<0.000000e+00> : vector<256x128xf32>
    %7 = tpu.matmul %5, %6, %cst_7 {dimension_numbers = #tpu.dot_dimension_numbers<[1], [0], [0], [1], [0, 0, 1, 1], [], []>} : vector<256x32xbf16>, vector<32x128xbf16>, vector<256x128xf32> -> vector<256x128xf32>
    %8 = arith.addf %3, %7 : vector<256x128xf32>
    %c0_8 = arith.constant 0 : index
    %c0_9 = arith.constant 0 : index
    %9 = vector.load %arg3[%c0_8, %c0_9] : memref<256x16xf32, #tpu.memory_space<vmem>>, vector<256x16xf32>
    %10 = arith.truncf %9 : vector<256x16xf32> to vector<256x16xbf16>
    %c0_10 = arith.constant 0 : index
    %c0_11 = arith.constant 0 : index
    %11 = vector.load %arg6[%c0_10, %c0_11] : memref<16x128xbf16, #tpu.memory_space<vmem>>, vector<16x128xbf16>
    %cst_12 = arith.constant dense<0.000000e+00> : vector<256x128xf32>
    %12 = tpu.matmul %10, %11, %cst_12 {dimension_numbers = #tpu.dot_dimension_numbers<[1], [0], [0], [1], [0, 0, 1, 1], [], []>} : vector<256x16xbf16>, vector<16x128xbf16>, vector<256x128xf32> -> vector<256x128xf32>
    %13 = arith.addf %8, %12 : vector<256x128xf32>
    %c0_13 = arith.constant 0 : index
    %c0_14 = arith.constant 0 : index
    %14 = vector.load %arg7[%c0_13, %c0_14] : memref<1x128xf32, #tpu.memory_space<vmem>>, vector<1x128xf32>
    %15 = vector.broadcast %14 : vector<1x128xf32> to vector<256x128xf32>
    %16 = arith.addf %13, %15 : vector<256x128xf32>
    %cst_15 = arith.constant 0.000000e+00 : f32
    %17 = vector.broadcast %cst_15 : f32 to vector<256x128xf32>
    %18 = arith.maximumf %16, %17 : vector<256x128xf32>
    %19 = arith.truncf %18 : vector<256x128xf32> to vector<256x128xbf16>
    %c0_16 = arith.constant 0 : index
    %c0_17 = arith.constant 0 : index
    %20 = vector.load %arg8[%c0_16, %c0_17] : memref<128x64xbf16, #tpu.memory_space<vmem>>, vector<128x64xbf16>
    %cst_18 = arith.constant dense<0.000000e+00> : vector<256x64xf32>
    %21 = tpu.matmul %19, %20, %cst_18 {dimension_numbers = #tpu.dot_dimension_numbers<[1], [0], [0], [1], [0, 0, 1, 1], [], []>} : vector<256x128xbf16>, vector<128x64xbf16>, vector<256x64xf32> -> vector<256x64xf32>
    %c0_19 = arith.constant 0 : index
    %c0_20 = arith.constant 0 : index
    %22 = vector.load %arg9[%c0_19, %c0_20] : memref<1x64xf32, #tpu.memory_space<vmem>>, vector<1x64xf32>
    %23 = vector.broadcast %22 : vector<1x64xf32> to vector<256x64xf32>
    %24 = arith.addf %21, %23 : vector<256x64xf32>
    %cst_21 = arith.constant 0.000000e+00 : f32
    %25 = vector.broadcast %cst_21 : f32 to vector<256x64xf32>
    %26 = arith.maximumf %24, %25 : vector<256x64xf32>
    %c0_22 = arith.constant 0 : index
    %c0_23 = arith.constant 0 : index
    %27 = vector.load %arg10[%c0_22, %c0_23] : memref<1x64xf32, #tpu.memory_space<vmem>>, vector<1x64xf32>
    %28 = vector.broadcast %27 : vector<1x64xf32> to vector<256x64xf32>
    %29 = arith.mulf %26, %28 : vector<256x64xf32>
    %cst_24 = arith.constant dense<0.000000e+00> : vector<256xf32>
    %30 = vector.multi_reduction <add>, %29, %cst_24 [1] : vector<256x64xf32> to vector<256xf32>
    %31 = vector.shape_cast %30 : vector<256xf32> to vector<256x1xf32>
    %32 = vector.shape_cast %31 : vector<256x1xf32> to vector<2x128xf32>
    %c0_25 = arith.constant 0 : index
    %c0_26 = arith.constant 0 : index
    %33 = vector.load %arg11[%c0_25, %c0_26] : memref<1x1xf32, #tpu.memory_space<vmem>>, vector<1x1xf32>
    %34 = vector.broadcast %33 : vector<1x1xf32> to vector<2x128xf32>
    %35 = arith.addf %32, %34 : vector<2x128xf32>
    %36 = arith.negf %35 : vector<2x128xf32>
    %37 = math.exp %36 : vector<2x128xf32>
    %cst_27 = arith.constant 1.000000e+00 : f32
    %38 = vector.broadcast %cst_27 : f32 to vector<2x128xf32>
    %39 = arith.addf %38, %37 : vector<2x128xf32>
    %40 = arith.divf %38, %39 : vector<2x128xf32>
    %c0_28 = arith.constant 0 : index
    %c0_29 = arith.constant 0 : index
    %41 = vector.load %arg12[%c0_28, %c0_29] : memref<2x128xf32, #tpu.memory_space<vmem>>, vector<2x128xf32>
    tpu.vector_store %arg12[%c0_28, %c0_29], %40 {strides = array<i32>} : memref<2x128xf32, #tpu.memory_space<vmem>>, vector<2x128xf32>,
    return
  }
  func.func @transform_0(%arg0: i32) -> (i32, i32) {
    %c0_i32 = arith.constant 0 : i32
    %c0_i32_0 = arith.constant 0 : i32
    return %arg0, %c0_i32 : i32, i32
  }
  func.func @transform_1(%arg0: i32) -> (i32, i32) {
    %c0_i32 = arith.constant 0 : i32
    %c0_i32_0 = arith.constant 0 : i32
    return %arg0, %c0_i32 : i32, i32
  }
  func.func @transform_2(%arg0: i32) -> (i32, i32) {
    %c0_i32 = arith.constant 0 : i32
    %c0_i32_0 = arith.constant 0 : i32
    return %arg0, %c0_i32 : i32, i32
  }
  func.func @transform_3(%arg0: i32) -> (i32, i32) {
    %c0_i32 = arith.constant 0 : i32
    %c0_i32_0 = arith.constant 0 : i32
    %c0_i32_1 = arith.constant 0 : i32
    return %c0_i32, %c0_i32_0 : i32, i32
  }
  func.func @transform_4(%arg0: i32) -> (i32, i32) {
    %c0_i32 = arith.constant 0 : i32
    %c0_i32_0 = arith.constant 0 : i32
    %c0_i32_1 = arith.constant 0 : i32
    return %c0_i32, %c0_i32_0 : i32, i32
  }
  func.func @transform_5(%arg0: i32) -> (i32, i32) {
    %c0_i32 = arith.constant 0 : i32
    %c0_i32_0 = arith.constant 0 : i32
    %c0_i32_1 = arith.constant 0 : i32
    return %c0_i32, %c0_i32_0 : i32, i32
  }
  func.func @transform_6(%arg0: i32) -> (i32, i32) {
    %c0_i32 = arith.constant 0 : i32
    %c0_i32_0 = arith.constant 0 : i32
    %c0_i32_1 = arith.constant 0 : i32
    return %c0_i32, %c0_i32_0 : i32, i32
  }
  func.func @transform_7(%arg0: i32) -> (i32, i32) {
    %c0_i32 = arith.constant 0 : i32
    %c0_i32_0 = arith.constant 0 : i32
    %c0_i32_1 = arith.constant 0 : i32
    return %c0_i32, %c0_i32_0 : i32, i32
  }
  func.func @transform_8(%arg0: i32) -> (i32, i32) {
    %c0_i32 = arith.constant 0 : i32
    %c0_i32_0 = arith.constant 0 : i32
    %c0_i32_1 = arith.constant 0 : i32
    return %c0_i32, %c0_i32_0 : i32, i32
  }
  func.func @transform_9(%arg0: i32) -> (i32, i32) {
    %c0_i32 = arith.constant 0 : i32
    %c0_i32_0 = arith.constant 0 : i32
    %c0_i32_1 = arith.constant 0 : i32
    return %c0_i32, %c0_i32_0 : i32, i32
  }
  func.func @transform_10(%arg0: i32) -> (i32, i32) {
    %c0_i32 = arith.constant 0 : i32
    %c0_i32_0 = arith.constant 0 : i32
    %c0_i32_1 = arith.constant 0 : i32
    return %c0_i32, %c0_i32_0 : i32, i32
  }
  func.func @transform_11(%arg0: i32) -> (i32, i32) {
    %c0_i32 = arith.constant 0 : i32
    %c0_i32_0 = arith.constant 0 : i32
    return %arg0, %c0_i32 : i32, i32
  }
}

</mosaic_0001>

<llo_original>
// kernel: tpu_custom_call.1
$region0: #{tpu_custom_call.1}
  #allocation0 [shape = 'u32[]', space=smem, size = 0x4, offset = 0x4, fixed_abs, tag = 'smem constant byte address 0x4 - core index']
  #allocation1 [shape = 'u32[144,128]{1,0:T(1,128)}', space=vmem, size = 0x12000, scoped, tag = 'internal scratch']
  #allocation2 [shape = 'f32[1,1]{1,0:T(1,128)S(1)}', space=vmem, size = 0x200, scoped, tag = 'scoped memory for tpu_custom_call.1']
  %s0 = inlined_call_operand.vmem [shape: f32[256,32], index: 0, kind: input, shape index: {}]
  %s1 = inlined_call_operand.vmem [shape: f32[256,32], index: 1, kind: input, shape index: {}]
  %s2 = inlined_call_operand.vmem [shape: f32[256,16], index: 2, kind: input, shape index: {}]
  %s3 = inlined_call_operand.vmem [shape: bf16[32,128], index: 3, kind: input, shape index: {}]
  %s4 = inlined_call_operand.vmem [shape: bf16[32,128], index: 4, kind: input, shape index: {}]
  %s5 = inlined_call_operand.vmem [shape: bf16[16,128], index: 5, kind: input, shape index: {}]
  %s6 = inlined_call_operand.vmem [shape: f32[1,128], index: 6, kind: input, shape index: {}]
  %s7 = inlined_call_operand.vmem [shape: bf16[128,64], index: 7, kind: input, shape index: {}]
  %s8 = inlined_call_operand.vmem [shape: f32[1,64], index: 8, kind: input, shape index: {}]
  %s9 = inlined_call_operand.vmem [shape: f32[1,64], index: 9, kind: input, shape index: {}]
  %s10 = inlined_call_operand.<no memory space> [shape: f32[1,1], index: 10, kind: input, shape index: {}]
  %s11 = inlined_call_operand.hbm [shape: f32[2,128], index: 11, kind: output, shape index: {}]
  %s12 = sld [smem:[#allocation0]]
  $region54: #{tpu_custom_call.1} parent=0
    _
  %s14 = ssub.s32 1, %s12
  %s15 = scalar_select 0, %s14, %s12
  %v16 = vstv %s10
  %17 = vst [vmem:[#allocation2] sm:$0x1] %v16
  $region1: #{tpu_custom_call.1} parent=0
    #allocation3 [shape = 'u8[1024]{0}', space=vmem, size = 0x400, scoped, tag = 'output window, operand 0, single buffered']
    #allocation4 [shape = 's32[1]{0}', space=sflag, size = 0x4, scoped, tag = 'scoped memory for tpu_custom_call.1']
    %18 = vsyncpa [#allocation4], 0
    // Predicated region
    $region2: #{tpu_custom_call.1} parent=1 // pred_check
      _
    $region3: #{tpu_custom_call.1} parent=1 // pred_check_branch
      %20 = sbr.rel (0) target = $region5
    $region4: #{tpu_custom_call.1} parent=1 // pred_region
      _
    $region5: #{tpu_custom_call.1} parent=1 // pred_fallthru
      _
    // Predicated region
    $region6: #{tpu_custom_call.1} parent=1 // pred_check
      _
    $region7: #{tpu_custom_call.1} parent=1 // pred_check_branch
      %22 = sbr.rel (0) target = $region9
    $region8: #{tpu_custom_call.1} parent=1 // pred_region
      _
    $region9: #{tpu_custom_call.1} parent=1 // pred_fallthru
      _
    // Predicated region
    $region10: #{tpu_custom_call.1} parent=1 // pred_check
      _
    $region11: #{tpu_custom_call.1} parent=1 // pred_check_branch
      %24 = sbr.rel (0) target = $region13
    $region12: #{tpu_custom_call.1} parent=1 // pred_region
      _
    $region13: #{tpu_custom_call.1} parent=1 // pred_fallthru
      _
    // Predicated region
    $region14: #{tpu_custom_call.1} parent=1 // pred_check
      _
    $region15: #{tpu_custom_call.1} parent=1 // pred_check_branch
      %26 = sbr.rel (0) target = $region17
    $region16: #{tpu_custom_call.1} parent=1 // pred_region
      _
    $region17: #{tpu_custom_call.1} parent=1 // pred_fallthru
      _
    // Predicated region
    $region18: #{tpu_custom_call.1} parent=1 // pred_check
      _
    $region19: #{tpu_custom_call.1} parent=1 // pred_check_branch
      %28 = sbr.rel (0) target = $region21
    $region20: #{tpu_custom_call.1} parent=1 // pred_region
      _
    $region21: #{tpu_custom_call.1} parent=1 // pred_fallthru
      _
    // Predicated region
    $region22: #{tpu_custom_call.1} parent=1 // pred_check
      _
    $region23: #{tpu_custom_call.1} parent=1 // pred_check_branch
      %30 = sbr.rel (0) target = $region25
    $region24: #{tpu_custom_call.1} parent=1 // pred_region
      _
    $region25: #{tpu_custom_call.1} parent=1 // pred_fallthru
      _
    // Predicated region
    $region26: #{tpu_custom_call.1} parent=1 // pred_check
      _
    $region27: #{tpu_custom_call.1} parent=1 // pred_check_branch
      %32 = sbr.rel (0) target = $region29
    $region28: #{tpu_custom_call.1} parent=1 // pred_region
      _
    $region29: #{tpu_custom_call.1} parent=1 // pred_fallthru
      _
    // Predicated region
    $region30: #{tpu_custom_call.1} parent=1 // pred_check
      _
    $region31: #{tpu_custom_call.1} parent=1 // pred_check_branch
      %34 = sbr.rel (0) target = $region33
    $region32: #{tpu_custom_call.1} parent=1 // pred_region
      _
    $region33: #{tpu_custom_call.1} parent=1 // pred_fallthru
      _
    // Predicated region
    $region34: #{tpu_custom_call.1} parent=1 // pred_check
      _
    $region35: #{tpu_custom_call.1} parent=1 // pred_check_branch
      %36 = sbr.rel (0) target = $region37
    $region36: #{tpu_custom_call.1} parent=1 // pred_region
      _
    $region37: #{tpu_custom_call.1} parent=1 // pred_fallthru
      _
    // Predicated region
    $region38: #{tpu_custom_call.1} parent=1 // pred_check
      _
    $region39: #{tpu_custom_call.1} parent=1 // pred_check_branch
      %38 = sbr.rel (0) target = $region41
    $region40: #{tpu_custom_call.1} parent=1 // pred_region
      _
    $region41: #{tpu_custom_call.1} parent=1 // pred_fallthru
      _
    // Predicated region
    $region42: #{tpu_custom_call.1} parent=1 // pred_check
      _
    $region43: #{tpu_custom_call.1} parent=1 // pred_check_branch
      %40 = sbr.rel (0) target = $region45
    $region44: #{tpu_custom_call.1} parent=1 // pred_region
      _
    $region45: #{tpu_custom_call.1} parent=1 // pred_fallthru
      _
    %v42 = vld [vmem:[%s0] sm:$0xff]
    %v43 = vld [vmem:[%s0 + $0x8] sm:$0xff]
    %v44 = vld [vmem:[%s0 + $0x10] sm:$0xff]
    %v45 = vld [vmem:[%s0 + $0x18] sm:$0xff]
    %v46 = vld [vmem:[%s0 + $0x20] sm:$0xff]
    %v47 = vld [vmem:[%s0 + $0x28] sm:$0xff]
    %v48 = vld [vmem:[%s0 + $0x30] sm:$0xff]
    %v49 = vld [vmem:[%s0 + $0x38] sm:$0xff]
    %v50 = vld [vmem:[%s0 + $0x40] sm:$0xff]
    %v51 = vld [vmem:[%s0 + $0x48] sm:$0xff]
    %v52 = vld [vmem:[%s0 + $0x50] sm:$0xff]
    %v53 = vld [vmem:[%s0 + $0x58] sm:$0xff]
    %v54 = vld [vmem:[%s0 + $0x60] sm:$0xff]
    %v55 = vld [vmem:[%s0 + $0x68] sm:$0xff]
    %v56 = vld [vmem:[%s0 + $0x70] sm:$0xff]
    %v57 = vld [vmem:[%s0 + $0x78] sm:$0xff]
    %v58 = vld [vmem:[%s0 + $0x80] sm:$0xff]
    %v59 = vld [vmem:[%s0 + $0x88] sm:$0xff]
    %v60 = vld [vmem:[%s0 + $0x90] sm:$0xff]
    %v61 = vld [vmem:[%s0 + $0x98] sm:$0xff]
    %v62 = vld [vmem:[%s0 + $0xa0] sm:$0xff]
    %v63 = vld [vmem:[%s0 + $0xa8] sm:$0xff]
    %v64 = vld [vmem:[%s0 + $0xb0] sm:$0xff]
    %v65 = vld [vmem:[%s0 + $0xb8] sm:$0xff]
    %v66 = vld [vmem:[%s0 + $0xc0] sm:$0xff]
    %v67 = vld [vmem:[%s0 + $0xc8] sm:$0xff]
    %v68 = vld [vmem:[%s0 + $0xd0] sm:$0xff]
    %v69 = vld [vmem:[%s0 + $0xd8] sm:$0xff]
    %v70 = vld [vmem:[%s0 + $0xe0] sm:$0xff]
    %v71 = vld [vmem:[%s0 + $0xe8] sm:$0xff]
    %v72 = vld [vmem:[%s0 + $0xf0] sm:$0xff]
    %v73 = vld [vmem:[%s0 + $0xf8] sm:$0xff]
    %v74 = vpack.c.bf16 %v43, %v42
    %v75 = vpack.c.bf16 %v45, %v44
    %v76 = vpack.c.bf16 %v47, %v46
    %v77 = vpack.c.bf16 %v49, %v48
    %v78 = vpack.c.bf16 %v51, %v50
    %v79 = vpack.c.bf16 %v53, %v52
    %v80 = vpack.c.bf16 %v55, %v54
    %v81 = vpack.c.bf16 %v57, %v56
    %v82 = vpack.c.bf16 %v59, %v58
    %v83 = vpack.c.bf16 %v61, %v60
    %v84 = vpack.c.bf16 %v63, %v62
    %v85 = vpack.c.bf16 %v65, %v64
    %v86 = vpack.c.bf16 %v67, %v66
    %v87 = vpack.c.bf16 %v69, %v68
    %v88 = vpack.c.bf16 %v71, %v70
    %v89 = vpack.c.bf16 %v73, %v72
    %v90 = vld [vmem:[%s3] sm:$0xf]
    %v91 = vld [vmem:[%s3 + $0x4] sm:$0xf]
    %v92 = vld [vmem:[%s3 + $0x8] sm:$0xf]
    %v93 = vld [vmem:[%s3 + $0xc] sm:$0xf]
    %v94 = vld [vmem:[%s1] sm:$0xff]
    %v95 = vld [vmem:[%s1 + $0x8] sm:$0xff]
    %v96 = vld [vmem:[%s1 + $0x10] sm:$0xff]
    %v97 = vld [vmem:[%s1 + $0x18] sm:$0xff]
    %v98 = vld [vmem:[%s1 + $0x20] sm:$0xff]
    %v99 = vld [vmem:[%s1 + $0x28] sm:$0xff]
    %v100 = vld [vmem:[%s1 + $0x30] sm:$0xff]
    %v101 = vld [vmem:[%s1 + $0x38] sm:$0xff]
    %v102 = vld [vmem:[%s1 + $0x40] sm:$0xff]
    %v103 = vld [vmem:[%s1 + $0x48] sm:$0xff]
    %v104 = vld [vmem:[%s1 + $0x50] sm:$0xff]
    %v105 = vld [vmem:[%s1 + $0x58] sm:$0xff]
    %v106 = vld [vmem:[%s1 + $0x60] sm:$0xff]
    %v107 = vld [vmem:[%s1 + $0x68] sm:$0xff]
    %v108 = vld [vmem:[%s1 + $0x70] sm:$0xff]
    %v109 = vld [vmem:[%s1 + $0x78] sm:$0xff]
    %v110 = vld [vmem:[%s1 + $0x80] sm:$0xff]
    %v111 = vld [vmem:[%s1 + $0x88] sm:$0xff]
    %v112 = vld [vmem:[%s1 + $0x90] sm:$0xff]
    %v113 = vld [vmem:[%s1 + $0x98] sm:$0xff]
    %v114 = vld [vmem:[%s1 + $0xa0] sm:$0xff]
    %v115 = vld [vmem:[%s1 + $0xa8] sm:$0xff]
    %v116 = vld [vmem:[%s1 + $0xb0] sm:$0xff]
    %v117 = vld [vmem:[%s1 + $0xb8] sm:$0xff]
    %v118 = vld [vmem:[%s1 + $0xc0] sm:$0xff]
    %v119 = vld [vmem:[%s1 + $0xc8] sm:$0xff]
    %v120 = vld [vmem:[%s1 + $0xd0] sm:$0xff]
    %v121 = vld [vmem:[%s1 + $0xd8] sm:$0xff]
    %v122 = vld [vmem:[%s1 + $0xe0] sm:$0xff]
    %v123 = vld [vmem:[%s1 + $0xe8] sm:$0xff]
    %v124 = vld [vmem:[%s1 + $0xf0] sm:$0xff]
    %v125 = vld [vmem:[%s1 + $0xf8] sm:$0xff]
    %v126 = vpack.c.bf16 %v95, %v94
    %v127 = vpack.c.bf16 %v97, %v96
    %v128 = vpack.c.bf16 %v99, %v98
    %v129 = vpack.c.bf16 %v101, %v100
    %v130 = vpack.c.bf16 %v103, %v102
    %v131 = vpack.c.bf16 %v105, %v104
    %v132 = vpack.c.bf16 %v107, %v106
    %v133 = vpack.c.bf16 %v109, %v108
    %v134 = vpack.c.bf16 %v111, %v110
    %v135 = vpack.c.bf16 %v113, %v112
    %v136 = vpack.c.bf16 %v115, %v114
    %v137 = vpack.c.bf16 %v117, %v116
    %v138 = vpack.c.bf16 %v119, %v118
    %v139 = vpack.c.bf16 %v121, %v120
    %v140 = vpack.c.bf16 %v123, %v122
    %v141 = vpack.c.bf16 %v125, %v124
    %v142 = vld [vmem:[%s4] sm:$0xf]
    %v143 = vld [vmem:[%s4 + $0x4] sm:$0xf]
    %v144 = vld [vmem:[%s4 + $0x8] sm:$0xf]
    %v145 = vld [vmem:[%s4 + $0xc] sm:$0xf]
    %v150 = vunpack.c.l.b16 %v142
    %v151 = vunpack.c.l.b16 %v143
    %v152 = vunpack.c.l.b16 %v144
    %v153 = vunpack.c.l.b16 %v145
    %v154 = vpack.c.b16 %v151, %v150
    %v155 = vpack.c.b16 %v153, %v152
    %vm158 = vcmask 261120
    %v160 = vsel %vm158, %v126, 0
    %v163 = vsel %vm158, %v127, 0
    %v166 = vsel %vm158, %v128, 0
    %v169 = vsel %vm158, %v129, 0
    %v172 = vsel %vm158, %v130, 0
    %v175 = vsel %vm158, %v131, 0
    %v178 = vsel %vm158, %v132, 0
    %v181 = vsel %vm158, %v133, 0
    %v184 = vsel %vm158, %v134, 0
    %v187 = vsel %vm158, %v135, 0
    %v190 = vsel %vm158, %v136, 0
    %v193 = vsel %vm158, %v137, 0
    %v196 = vsel %vm158, %v138, 0
    %v199 = vsel %vm158, %v139, 0
    %v202 = vsel %vm158, %v140, 0
    %v205 = vsel %vm158, %v141, 0
    %207 = vmatprep.subr.bf16.mxu0 0
    %208 = vmatpush1.bf16.msra.mxu0 %v154
    %209 = vmatprep.subr.bf16.mxu0 0
    %210 = vmatpush1.bf16.msra.mxu0 %v155
    %211 = vmatprep.subr.bf16.mxu0 0
    %212 = vmatpush1.bf16.msra.mxu0 0
    %213 = vmatprep.subr.bf16.mxu0 0
    %214 = vmatpush1.bf16.msra.mxu0 0
    %215 = vmatprep.subr.bf16.mxu0 0
    %216 = vmatpush1.bf16.msra.mxu0 0
    %217 = vmatprep.subr.bf16.mxu0 0
    %218 = vmatpush1.bf16.msra.mxu0 0
    %219 = vmatprep.subr.bf16.mxu0 0
    %220 = vmatpush1.bf16.msra.mxu0 0
    %221 = vmatprep.subr.bf16.mxu0 0
    %222 = vmatpush1.bf16.msra.mxu0 0
    %223 = vmatprep.subr.bf16.mxu0 0
    %224 = vmatpush1.bf16.msra.mxu0 0
    %225 = vmatprep.subr.bf16.mxu0 0
    %226 = vmatpush1.bf16.msra.mxu0 0
    %227 = vmatprep.subr.bf16.mxu0 0
    %228 = vmatpush1.bf16.msra.mxu0 0
    %229 = vmatprep.subr.bf16.mxu0 0
    %230 = vmatpush1.bf16.msra.mxu0 0
    %231 = vmatprep.subr.bf16.mxu0 0
    %232 = vmatpush1.bf16.msra.mxu0 0
    %233 = vmatprep.subr.bf16.mxu0 0
    %234 = vmatpush1.bf16.msra.mxu0 0
    %235 = vmatprep.subr.bf16.mxu0 0
    %236 = vmatpush1.bf16.msra.mxu0 0
    %237 = vmatprep.subr.bf16.mxu0 0
    %238 = vmatpush1.bf16.msra.mxu0 0
    %239 = vmatprep.mubr.bf16.mxu0 0
    %240 = vmatmul.mubr.bf16.gmra.mrb[0].mxu0 %v160
    %v241 = vpop.f32.mrb[0].mxu0
    %v242 = vadd.f32 0.0, %v241
    %v243 = vpop.f32.mrb[0].mxu0
    %v244 = vpop.f32.mrb[0].mxu0
    %v245 = vadd.f32 0.0, %v244
    %v246 = vpop.f32.mrb[0].mxu0
    %247 = vmatprep.mubr.bf16.mxu0 0
    %248 = vmatmul.mubr.bf16.gmra.mrb[0].mxu0 %v163
    %v249 = vpop.f32.mrb[0].mxu0
    %v250 = vadd.f32 0.0, %v249
    %v251 = vpop.f32.mrb[0].mxu0
    %v252 = vpop.f32.mrb[0].mxu0
    %v253 = vadd.f32 0.0, %v252
    %v254 = vpop.f32.mrb[0].mxu0
    %255 = vmatprep.mubr.bf16.mxu0 0
    %256 = vmatmul.mubr.bf16.gmra.mrb[0].mxu0 %v166
    %v257 = vpop.f32.mrb[0].mxu0
    %v258 = vadd.f32 0.0, %v257
    %v259 = vpop.f32.mrb[0].mxu0
    %v260 = vpop.f32.mrb[0].mxu0
    %v261 = vadd.f32 0.0, %v260
    %v262 = vpop.f32.mrb[0].mxu0
    %263 = vmatprep.mubr.bf16.mxu0 0
    %264 = vmatmul.mubr.bf16.gmra.mrb[0].mxu0 %v169
    %v265 = vpop.f32.mrb[0].mxu0
    %v266 = vadd.f32 0.0, %v265
    %v267 = vpop.f32.mrb[0].mxu0
    %v268 = vpop.f32.mrb[0].mxu0
    %v269 = vadd.f32 0.0, %v268
    %v270 = vpop.f32.mrb[0].mxu0
    %271 = vmatprep.mubr.bf16.mxu0 0
    %272 = vmatmul.mubr.bf16.gmra.mrb[0].mxu0 %v172
    %v273 = vpop.f32.mrb[0].mxu0
    %v274 = vadd.f32 0.0, %v273
    %v275 = vpop.f32.mrb[0].mxu0
    %v276 = vpop.f32.mrb[0].mxu0
    %v277 = vadd.f32 0.0, %v276
    %v278 = vpop.f32.mrb[0].mxu0
    %279 = vmatprep.mubr.bf16.mxu0 0
    %280 = vmatmul.mubr.bf16.gmra.mrb[0].mxu0 %v175
    %v281 = vpop.f32.mrb[0].mxu0
    %v282 = vadd.f32 0.0, %v281
    %v283 = vpop.f32.mrb[0].mxu0
    %v284 = vpop.f32.mrb[0].mxu0
    %v285 = vadd.f32 0.0, %v284
    %v286 = vpop.f32.mrb[0].mxu0
    %287 = vmatprep.mubr.bf16.mxu0 0
    %288 = vmatmul.mubr.bf16.gmra.mrb[0].mxu0 %v178
    %v289 = vpop.f32.mrb[0].mxu0
    %v290 = vadd.f32 0.0, %v289
    %v291 = vpop.f32.mrb[0].mxu0
    %v292 = vpop.f32.mrb[0].mxu0
    %v293 = vadd.f32 0.0, %v292
    %v294 = vpop.f32.mrb[0].mxu0
    %295 = vmatprep.mubr.bf16.mxu0 0
    %296 = vmatmul.mubr.bf16.gmra.mrb[0].mxu0 %v181
    %v297 = vpop.f32.mrb[0].mxu0
    %v298 = vadd.f32 0.0, %v297
    %v299 = vpop.f32.mrb[0].mxu0
    %v300 = vpop.f32.mrb[0].mxu0
    %v301 = vadd.f32 0.0, %v300
    %v302 = vpop.f32.mrb[0].mxu0
    %303 = vmatprep.mubr.bf16.mxu0 0
    %304 = vmatmul.mubr.bf16.gmra.mrb[0].mxu0 %v184
    %v305 = vpop.f32.mrb[0].mxu0
    %v306 = vadd.f32 0.0, %v305
    %v307 = vpop.f32.mrb[0].mxu0
    %v308 = vpop.f32.mrb[0].mxu0
    %v309 = vadd.f32 0.0, %v308
    %v310 = vpop.f32.mrb[0].mxu0
    %311 = vmatprep.mubr.bf16.mxu0 0
    %312 = vmatmul.mubr.bf16.gmra.mrb[0].mxu0 %v187
    %v313 = vpop.f32.mrb[0].mxu0
    %v314 = vadd.f32 0.0, %v313
    %v315 = vpop.f32.mrb[0].mxu0
    %v316 = vpop.f32.mrb[0].mxu0
    %v317 = vadd.f32 0.0, %v316
    %v318 = vpop.f32.mrb[0].mxu0
    %319 = vmatprep.mubr.bf16.mxu0 0
    %320 = vmatmul.mubr.bf16.gmra.mrb[0].mxu0 %v190
    %v321 = vpop.f32.mrb[0].mxu0
    %v322 = vadd.f32 0.0, %v321
    %v323 = vpop.f32.mrb[0].mxu0
    %v324 = vpop.f32.mrb[0].mxu0
    %v325 = vadd.f32 0.0, %v324
    %v326 = vpop.f32.mrb[0].mxu0
    %327 = vmatprep.mubr.bf16.mxu0 0
    %328 = vmatmul.mubr.bf16.gmra.mrb[0].mxu0 %v193
    %v329 = vpop.f32.mrb[0].mxu0
    %v330 = vadd.f32 0.0, %v329
    %v331 = vpop.f32.mrb[0].mxu0
    %v332 = vpop.f32.mrb[0].mxu0
    %v333 = vadd.f32 0.0, %v332
    %v334 = vpop.f32.mrb[0].mxu0
    %335 = vmatprep.mubr.bf16.mxu0 0
    %336 = vmatmul.mubr.bf16.gmra.mrb[0].mxu0 %v196
    %v337 = vpop.f32.mrb[0].mxu0
    %v338 = vadd.f32 0.0, %v337
    %v339 = vpop.f32.mrb[0].mxu0
    %v340 = vpop.f32.mrb[0].mxu0
    %v341 = vadd.f32 0.0, %v340
    %v342 = vpop.f32.mrb[0].mxu0
    %343 = vmatprep.mubr.bf16.mxu0 0
    %344 = vmatmul.mubr.bf16.gmra.mrb[0].mxu0 %v199
    %v345 = vpop.f32.mrb[0].mxu0
    %v346 = vadd.f32 0.0, %v345
    %v347 = vpop.f32.mrb[0].mxu0
    %v348 = vpop.f32.mrb[0].mxu0
    %v349 = vadd.f32 0.0, %v348
    %v350 = vpop.f32.mrb[0].mxu0
    %351 = vmatprep.mubr.bf16.mxu0 0
    %352 = vmatmul.mubr.bf16.gmra.mrb[0].mxu0 %v202
    %v353 = vpop.f32.mrb[0].mxu0
    %v354 = vadd.f32 0.0, %v353
    %v355 = vpop.f32.mrb[0].mxu0
    %v356 = vpop.f32.mrb[0].mxu0
    %v357 = vadd.f32 0.0, %v356
    %v358 = vpop.f32.mrb[0].mxu0
    %359 = vmatprep.mubr.bf16.mxu0 0
    %360 = vmatmul.mubr.bf16.gmra.mrb[0].mxu0 %v205
    %v361 = vpop.f32.mrb[0].mxu0
    %v362 = vadd.f32 0.0, %v361
    %v363 = vpop.f32.mrb[0].mxu0
    %v364 = vpop.f32.mrb[0].mxu0
    %v365 = vadd.f32 0.0, %v364
    %v366 = vpop.f32.mrb[0].mxu0
    %367 = vdwg.mxu0
    %v372 = vunpack.c.l.b16 %v90
    %v373 = vunpack.c.l.b16 %v91
    %v374 = vunpack.c.l.b16 %v92
    %v375 = vunpack.c.l.b16 %v93
    %v376 = vpack.c.b16 %v373, %v372
    %v377 = vpack.c.b16 %v375, %v374
    %v381 = vsel %vm158, %v74, 0
    %v384 = vsel %vm158, %v75, 0
    %v387 = vsel %vm158, %v76, 0
    %v390 = vsel %vm158, %v77, 0
    %v393 = vsel %vm158, %v78, 0
    %v396 = vsel %vm158, %v79, 0
    %v399 = vsel %vm158, %v80, 0
    %v402 = vsel %vm158, %v81, 0
    %v405 = vsel %vm158, %v82, 0
    %v408 = vsel %vm158, %v83, 0
    %v411 = vsel %vm158, %v84, 0
    %v414 = vsel %vm158, %v85, 0
    %v417 = vsel %vm158, %v86, 0
    %v420 = vsel %vm158, %v87, 0
    %v423 = vsel %vm158, %v88, 0
    %v426 = vsel %vm158, %v89, 0
    %428 = vmatprep.subr.bf16.mxu0 0
    %429 = vmatpush1.bf16.msra.mxu0 %v376
    %430 = vmatprep.subr.bf16.mxu0 0
    %431 = vmatpush1.bf16.msra.mxu0 %v377
    %432 = vmatprep.subr.bf16.mxu0 0
    %433 = vmatpush1.bf16.msra.mxu0 0
    %434 = vmatprep.subr.bf16.mxu0 0
    %435 = vmatpush1.bf16.msra.mxu0 0
    %436 = vmatprep.subr.bf16.mxu0 0
    %437 = vmatpush1.bf16.msra.mxu0 0
    %438 = vmatprep.subr.bf16.mxu0 0
    %439 = vmatpush1.bf16.msra.mxu0 0
    %440 = vmatprep.subr.bf16.mxu0 0
    %441 = vmatpush1.bf16.msra.mxu0 0
    %442 = vmatprep.subr.bf16.mxu0 0
    %443 = vmatpush1.bf16.msra.mxu0 0
    %444 = vmatprep.subr.bf16.mxu0 0
    %445 = vmatpush1.bf16.msra.mxu0 0
    %446 = vmatprep.subr.bf16.mxu0 0
    %447 = vmatpush1.bf16.msra.mxu0 0
    %448 = vmatprep.subr.bf16.mxu0 0
    %449 = vmatpush1.bf16.msra.mxu0 0
    %450 = vmatprep.subr.bf16.mxu0 0
    %451 = vmatpush1.bf16.msra.mxu0 0
    %452 = vmatprep.subr.bf16.mxu0 0
    %453 = vmatpush1.bf16.msra.mxu0 0
    %454 = vmatprep.subr.bf16.mxu0 0
    %455 = vmatpush1.bf16.msra.mxu0 0
    %456 = vmatprep.subr.bf16.mxu0 0
    %457 = vmatpush1.bf16.msra.mxu0 0
    %458 = vmatprep.subr.bf16.mxu0 0
    %459 = vmatpush1.bf16.msra.mxu0 0
    %460 = vmatprep.mubr.bf16.mxu0 0
    %461 = vmatmul.mubr.bf16.gmra.mrb[0].mxu0 %v381
    %v462 = vpop.f32.mrb[0].mxu0
    %v463 = vadd.f32 %v242, %v462
    %v464 = vpop.f32.mrb[0].mxu0
    %v465 = vpop.f32.mrb[0].mxu0
    %v466 = vadd.f32 %v245, %v465
    %v467 = vpop.f32.mrb[0].mxu0
    %468 = vmatprep.mubr.bf16.mxu0 0
    %469 = vmatmul.mubr.bf16.gmra.mrb[0].mxu0 %v384
    %v470 = vpop.f32.mrb[0].mxu0
    %v471 = vadd.f32 %v250, %v470
    %v472 = vpop.f32.mrb[0].mxu0
    %v473 = vpop.f32.mrb[0].mxu0
    %v474 = vadd.f32 %v253, %v473
    %v475 = vpop.f32.mrb[0].mxu0
    %476 = vmatprep.mubr.bf16.mxu0 0
    %477 = vmatmul.mubr.bf16.gmra.mrb[0].mxu0 %v387
    %v478 = vpop.f32.mrb[0].mxu0
    %v479 = vadd.f32 %v258, %v478
    %v480 = vpop.f32.mrb[0].mxu0
    %v481 = vpop.f32.mrb[0].mxu0
    %v482 = vadd.f32 %v261, %v481
    %v483 = vpop.f32.mrb[0].mxu0
    %484 = vmatprep.mubr.bf16.mxu0 0
    %485 = vmatmul.mubr.bf16.gmra.mrb[0].mxu0 %v390
    %v486 = vpop.f32.mrb[0].mxu0
    %v487 = vadd.f32 %v266, %v486
    %v488 = vpop.f32.mrb[0].mxu0
    %v489 = vpop.f32.mrb[0].mxu0
    %v490 = vadd.f32 %v269, %v489
    %v491 = vpop.f32.mrb[0].mxu0
    %492 = vmatprep.mubr.bf16.mxu0 0
    %493 = vmatmul.mubr.bf16.gmra.mrb[0].mxu0 %v393
    %v494 = vpop.f32.mrb[0].mxu0
    %v495 = vadd.f32 %v274, %v494
    %v496 = vpop.f32.mrb[0].mxu0
    %v497 = vpop.f32.mrb[0].mxu0
    %v498 = vadd.f32 %v277, %v497
    %v499 = vpop.f32.mrb[0].mxu0
    %500 = vmatprep.mubr.bf16.mxu0 0
    %501 = vmatmul.mubr.bf16.gmra.mrb[0].mxu0 %v396
    %v502 = vpop.f32.mrb[0].mxu0
    %v503 = vadd.f32 %v282, %v502
    %v504 = vpop.f32.mrb[0].mxu0
    %v505 = vpop.f32.mrb[0].mxu0
    %v506 = vadd.f32 %v285, %v505
    %v507 = vpop.f32.mrb[0].mxu0
    %508 = vmatprep.mubr.bf16.mxu0 0
    %509 = vmatmul.mubr.bf16.gmra.mrb[0].mxu0 %v399
    %v510 = vpop.f32.mrb[0].mxu0
    %v511 = vadd.f32 %v290, %v510
    %v512 = vpop.f32.mrb[0].mxu0
    %v513 = vpop.f32.mrb[0].mxu0
    %v514 = vadd.f32 %v293, %v513
    %v515 = vpop.f32.mrb[0].mxu0
    %516 = vmatprep.mubr.bf16.mxu0 0
    %517 = vmatmul.mubr.bf16.gmra.mrb[0].mxu0 %v402
    %v518 = vpop.f32.mrb[0].mxu0
    %v519 = vadd.f32 %v298, %v518
    %v520 = vpop.f32.mrb[0].mxu0
    %v521 = vpop.f32.mrb[0].mxu0
    %v522 = vadd.f32 %v301, %v521
    %v523 = vpop.f32.mrb[0].mxu0
    %524 = vmatprep.mubr.bf16.mxu0 0
    %525 = vmatmul.mubr.bf16.gmra.mrb[0].mxu0 %v405
    %v526 = vpop.f32.mrb[0].mxu0
    %v527 = vadd.f32 %v306, %v526
    %v528 = vpop.f32.mrb[0].mxu0
    %v529 = vpop.f32.mrb[0].mxu0
    %v530 = vadd.f32 %v309, %v529
    %v531 = vpop.f32.mrb[0].mxu0
    %532 = vmatprep.mubr.bf16.mxu0 0
    %533 = vmatmul.mubr.bf16.gmra.mrb[0].mxu0 %v408
    %v534 = vpop.f32.mrb[0].mxu0
    %v535 = vadd.f32 %v314, %v534
    %v536 = vpop.f32.mrb[0].mxu0
    %v537 = vpop.f32.mrb[0].mxu0
    %v538 = vadd.f32 %v317, %v537
    %v539 = vpop.f32.mrb[0].mxu0
    %540 = vmatprep.mubr.bf16.mxu0 0
    %541 = vmatmul.mubr.bf16.gmra.mrb[0].mxu0 %v411
    %v542 = vpop.f32.mrb[0].mxu0
    %v543 = vadd.f32 %v322, %v542
    %v544 = vpop.f32.mrb[0].mxu0
    %v545 = vpop.f32.mrb[0].mxu0
    %v546 = vadd.f32 %v325, %v545
    %v547 = vpop.f32.mrb[0].mxu0
    %548 = vmatprep.mubr.bf16.mxu0 0
    %549 = vmatmul.mubr.bf16.gmra.mrb[0].mxu0 %v414
    %v550 = vpop.f32.mrb[0].mxu0
    %v551 = vadd.f32 %v330, %v550
    %v552 = vpop.f32.mrb[0].mxu0
    %v553 = vpop.f32.mrb[0].mxu0
    %v554 = vadd.f32 %v333, %v553
    %v555 = vpop.f32.mrb[0].mxu0
    %556 = vmatprep.mubr.bf16.mxu0 0
    %557 = vmatmul.mubr.bf16.gmra.mrb[0].mxu0 %v417
    %v558 = vpop.f32.mrb[0].mxu0
    %v559 = vadd.f32 %v338, %v558
    %v560 = vpop.f32.mrb[0].mxu0
    %v561 = vpop.f32.mrb[0].mxu0
    %v562 = vadd.f32 %v341, %v561
    %v563 = vpop.f32.mrb[0].mxu0
    %564 = vmatprep.mubr.bf16.mxu0 0
    %565 = vmatmul.mubr.bf16.gmra.mrb[0].mxu0 %v420
    %v566 = vpop.f32.mrb[0].mxu0
    %v567 = vadd.f32 %v346, %v566
    %v568 = vpop.f32.mrb[0].mxu0
    %v569 = vpop.f32.mrb[0].mxu0
    %v570 = vadd.f32 %v349, %v569
    %v571 = vpop.f32.mrb[0].mxu0
    %572 = vmatprep.mubr.bf16.mxu0 0
    %573 = vmatmul.mubr.bf16.gmra.mrb[0].mxu0 %v423
    %v574 = vpop.f32.mrb[0].mxu0
    %v575 = vadd.f32 %v354, %v574
    %v576 = vpop.f32.mrb[0].mxu0
    %v577 = vpop.f32.mrb[0].mxu0
    %v578 = vadd.f32 %v357, %v577
    %v579 = vpop.f32.mrb[0].mxu0
    %580 = vmatprep.mubr.bf16.mxu0 0
    %581 = vmatmul.mubr.bf16.gmra.mrb[0].mxu0 %v426
    %v582 = vpop.f32.mrb[0].mxu0
    %v583 = vadd.f32 %v362, %v582
    %v584 = vpop.f32.mrb[0].mxu0
    %v585 = vpop.f32.mrb[0].mxu0
    %v586 = vadd.f32 %v365, %v585
    %v587 = vpop.f32.mrb[0].mxu0
    %588 = vdwg.mxu0
    %v589 = vld [vmem:[%s2] sm:$0xff]
    %v590 = vld [vmem:[%s2 + $0x8] sm:$0xff]
    %v591 = vld [vmem:[%s2 + $0x10] sm:$0xff]
    %v592 = vld [vmem:[%s2 + $0x18] sm:$0xff]
    %v593 = vld [vmem:[%s2 + $0x20] sm:$0xff]
    %v594 = vld [vmem:[%s2 + $0x28] sm:$0xff]
    %v595 = vld [vmem:[%s2 + $0x30] sm:$0xff]
    %v596 = vld [vmem:[%s2 + $0x38] sm:$0xff]
    %v597 = vld [vmem:[%s2 + $0x40] sm:$0xff]
    %v598 = vld [vmem:[%s2 + $0x48] sm:$0xff]
    %v599 = vld [vmem:[%s2 + $0x50] sm:$0xff]
    %v600 = vld [vmem:[%s2 + $0x58] sm:$0xff]
    %v601 = vld [vmem:[%s2 + $0x60] sm:$0xff]
    %v602 = vld [vmem:[%s2 + $0x68] sm:$0xff]
    %v603 = vld [vmem:[%s2 + $0x70] sm:$0xff]
    %v604 = vld [vmem:[%s2 + $0x78] sm:$0xff]
    %v605 = vld [vmem:[%s2 + $0x80] sm:$0xff]
    %v606 = vld [vmem:[%s2 + $0x88] sm:$0xff]
    %v607 = vld [vmem:[%s2 + $0x90] sm:$0xff]
    %v608 = vld [vmem:[%s2 + $0x98] sm:$0xff]
    %v609 = vld [vmem:[%s2 + $0xa0] sm:$0xff]
    %v610 = vld [vmem:[%s2 + $0xa8] sm:$0xff]
    %v611 = vld [vmem:[%s2 + $0xb0] sm:$0xff]
    %v612 = vld [vmem:[%s2 + $0xb8] sm:$0xff]
    %v613 = vld [vmem:[%s2 + $0xc0] sm:$0xff]
    %v614 = vld [vmem:[%s2 + $0xc8] sm:$0xff]
    %v615 = vld [vmem:[%s2 + $0xd0] sm:$0xff]
    %v616 = vld [vmem:[%s2 + $0xd8] sm:$0xff]
    %v617 = vld [vmem:[%s2 + $0xe0] sm:$0xff]
    %v618 = vld [vmem:[%s2 + $0xe8] sm:$0xff]
    %v619 = vld [vmem:[%s2 + $0xf0] sm:$0xff]
    %v620 = vld [vmem:[%s2 + $0xf8] sm:$0xff]
    %v621 = vpack.c.bf16 %v590, %v589
    %v622 = vpack.c.bf16 %v592, %v591
    %v623 = vpack.c.bf16 %v594, %v593
    %v624 = vpack.c.bf16 %v596, %v595
    %v625 = vpack.c.bf16 %v598, %v597
    %v626 = vpack.c.bf16 %v600, %v599
    %v627 = vpack.c.bf16 %v602, %v601
    %v628 = vpack.c.bf16 %v604, %v603
    %v629 = vpack.c.bf16 %v606, %v605
    %v630 = vpack.c.bf16 %v608, %v607
    %v631 = vpack.c.bf16 %v610, %v609
    %v632 = vpack.c.bf16 %v612, %v611
    %v633 = vpack.c.bf16 %v614, %v613
    %v634 = vpack.c.bf16 %v616, %v615
    %v635 = vpack.c.bf16 %v618, %v617
    %v636 = vpack.c.bf16 %v620, %v619
    %v637 = vld [vmem:[%s5] sm:$0xf]
    %v638 = vld [vmem:[%s5 + $0x4] sm:$0xf]
    %v641 = vunpack.c.l.b16 %v637
    %v642 = vunpack.c.l.b16 %v638
    %v643 = vpack.c.b16 %v642, %v641
    %vm645 = vcmask 130048
    %v647 = vsel %vm645, %v621, 0
    %v650 = vsel %vm645, %v622, 0
    %v653 = vsel %vm645, %v623, 0
    %v656 = vsel %vm645, %v624, 0
    %v659 = vsel %vm645, %v625, 0
    %v662 = vsel %vm645, %v626, 0
    %v665 = vsel %vm645, %v627, 0
    %v668 = vsel %vm645, %v628, 0
    %v671 = vsel %vm645, %v629, 0
    %v674 = vsel %vm645, %v630, 0
    %v677 = vsel %vm645, %v631, 0
    %v680 = vsel %vm645, %v632, 0
    %v683 = vsel %vm645, %v633, 0
    %v686 = vsel %vm645, %v634, 0
    %v689 = vsel %vm645, %v635, 0
    %v692 = vsel %vm645, %v636, 0
    %694 = vmatprep.subr.bf16.mxu0 0
    %695 = vmatpush1.bf16.msra.mxu0 %v643
    %696 = vmatprep.subr.bf16.mxu0 0
    %697 = vmatpush1.bf16.msra.mxu0 0
    %698 = vmatprep.subr.bf16.mxu0 0
    %699 = vmatpush1.bf16.msra.mxu0 0
    %700 = vmatprep.subr.bf16.mxu0 0
    %701 = vmatpush1.bf16.msra.mxu0 0
    %702 = vmatprep.subr.bf16.mxu0 0
    %703 = vmatpush1.bf16.msra.mxu0 0
    %704 = vmatprep.subr.bf16.mxu0 0
    %705 = vmatpush1.bf16.msra.mxu0 0
    %706 = vmatprep.subr.bf16.mxu0 0
    %707 = vmatpush1.bf16.msra.mxu0 0
    %708 = vmatprep.subr.bf16.mxu0 0
    %709 = vmatpush1.bf16.msra.mxu0 0
    %710 = vmatprep.subr.bf16.mxu0 0
    %711 = vmatpush1.bf16.msra.mxu0 0
    %712 = vmatprep.subr.bf16.mxu0 0
    %713 = vmatpush1.bf16.msra.mxu0 0
    %714 = vmatprep.subr.bf16.mxu0 0
    %715 = vmatpush1.bf16.msra.mxu0 0
    %716 = vmatprep.subr.bf16.mxu0 0
    %717 = vmatpush1.bf16.msra.mxu0 0
    %718 = vmatprep.subr.bf16.mxu0 0
    %719 = vmatpush1.bf16.msra.mxu0 0
    %720 = vmatprep.subr.bf16.mxu0 0
    %721 = vmatpush1.bf16.msra.mxu0 0
    %722 = vmatprep.subr.bf16.mxu0 0
    %723 = vmatpush1.bf16.msra.mxu0 0
    %724 = vmatprep.subr.bf16.mxu0 0
    %725 = vmatpush1.bf16.msra.mxu0 0
    %726 = vmatprep.mubr.bf16.mxu0 0
    %727 = vmatmul.mubr.bf16.gmra.mrb[0].mxu0 %v647
    %v728 = vpop.f32.mrb[0].mxu0
    %v729 = vadd.f32 0.0, %v728
    %v730 = vpop.f32.mrb[0].mxu0
    %v731 = vpop.f32.mrb[0].mxu0
    %v732 = vadd.f32 0.0, %v731
    %v733 = vpop.f32.mrb[0].mxu0
    %734 = vmatprep.mubr.bf16.mxu0 0
    %735 = vmatmul.mubr.bf16.gmra.mrb[0].mxu0 %v650
    %v736 = vpop.f32.mrb[0].mxu0
    %v737 = vadd.f32 0.0, %v736
    %v738 = vpop.f32.mrb[0].mxu0
    %v739 = vpop.f32.mrb[0].mxu0
    %v740 = vadd.f32 0.0, %v739
    %v741 = vpop.f32.mrb[0].mxu0
    %742 = vmatprep.mubr.bf16.mxu0 0
    %743 = vmatmul.mubr.bf16.gmra.mrb[0].mxu0 %v653
    %v744 = vpop.f32.mrb[0].mxu0
    %v745 = vadd.f32 0.0, %v744
    %v746 = vpop.f32.mrb[0].mxu0
    %v747 = vpop.f32.mrb[0].mxu0
    %v748 = vadd.f32 0.0, %v747
    %v749 = vpop.f32.mrb[0].mxu0
    %750 = vmatprep.mubr.bf16.mxu0 0
    %751 = vmatmul.mubr.bf16.gmra.mrb[0].mxu0 %v656
    %v752 = vpop.f32.mrb[0].mxu0
    %v753 = vadd.f32 0.0, %v752
    %v754 = vpop.f32.mrb[0].mxu0
    %v755 = vpop.f32.mrb[0].mxu0
    %v756 = vadd.f32 0.0, %v755
    %v757 = vpop.f32.mrb[0].mxu0
    %758 = vmatprep.mubr.bf16.mxu0 0
    %759 = vmatmul.mubr.bf16.gmra.mrb[0].mxu0 %v659
    %v760 = vpop.f32.mrb[0].mxu0
    %v761 = vadd.f32 0.0, %v760
    %v762 = vpop.f32.mrb[0].mxu0
    %v763 = vpop.f32.mrb[0].mxu0
    %v764 = vadd.f32 0.0, %v763
    %v765 = vpop.f32.mrb[0].mxu0
    %766 = vmatprep.mubr.bf16.mxu0 0
    %767 = vmatmul.mubr.bf16.gmra.mrb[0].mxu0 %v662
    %v768 = vpop.f32.mrb[0].mxu0
    %v769 = vadd.f32 0.0, %v768
    %v770 = vpop.f32.mrb[0].mxu0
    %v771 = vpop.f32.mrb[0].mxu0
    %v772 = vadd.f32 0.0, %v771
    %v773 = vpop.f32.mrb[0].mxu0
    %774 = vmatprep.mubr.bf16.mxu0 0
    %775 = vmatmul.mubr.bf16.gmra.mrb[0].mxu0 %v665
    %v776 = vpop.f32.mrb[0].mxu0
    %v777 = vadd.f32 0.0, %v776
    %v778 = vpop.f32.mrb[0].mxu0
    %v779 = vpop.f32.mrb[0].mxu0
    %v780 = vadd.f32 0.0, %v779
    %v781 = vpop.f32.mrb[0].mxu0
    %782 = vmatprep.mubr.bf16.mxu0 0
    %783 = vmatmul.mubr.bf16.gmra.mrb[0].mxu0 %v668
    %v784 = vpop.f32.mrb[0].mxu0
    %v785 = vadd.f32 0.0, %v784
    %v786 = vpop.f32.mrb[0].mxu0
    %v787 = vpop.f32.mrb[0].mxu0
    %v788 = vadd.f32 0.0, %v787
    %v789 = vpop.f32.mrb[0].mxu0
    %790 = vmatprep.mubr.bf16.mxu0 0
    %791 = vmatmul.mubr.bf16.gmra.mrb[0].mxu0 %v671
    %v792 = vpop.f32.mrb[0].mxu0
    %v793 = vadd.f32 0.0, %v792
    %v794 = vpop.f32.mrb[0].mxu0
    %v795 = vpop.f32.mrb[0].mxu0
    %v796 = vadd.f32 0.0, %v795
    %v797 = vpop.f32.mrb[0].mxu0
    %798 = vmatprep.mubr.bf16.mxu0 0
    %799 = vmatmul.mubr.bf16.gmra.mrb[0].mxu0 %v674
    %v800 = vpop.f32.mrb[0].mxu0
    %v801 = vadd.f32 0.0, %v800
    %v802 = vpop.f32.mrb[0].mxu0
    %v803 = vpop.f32.mrb[0].mxu0
    %v804 = vadd.f32 0.0, %v803
    %v805 = vpop.f32.mrb[0].mxu0
    %806 = vmatprep.mubr.bf16.mxu0 0
    %807 = vmatmul.mubr.bf16.gmra.mrb[0].mxu0 %v677
    %v808 = vpop.f32.mrb[0].mxu0
    %v809 = vadd.f32 0.0, %v808
    %v810 = vpop.f32.mrb[0].mxu0
    %v811 = vpop.f32.mrb[0].mxu0
    %v812 = vadd.f32 0.0, %v811
    %v813 = vpop.f32.mrb[0].mxu0
    %814 = vmatprep.mubr.bf16.mxu0 0
    %815 = vmatmul.mubr.bf16.gmra.mrb[0].mxu0 %v680
    %v816 = vpop.f32.mrb[0].mxu0
    %v817 = vadd.f32 0.0, %v816
    %v818 = vpop.f32.mrb[0].mxu0
    %v819 = vpop.f32.mrb[0].mxu0
    %v820 = vadd.f32 0.0, %v819
    %v821 = vpop.f32.mrb[0].mxu0
    %822 = vmatprep.mubr.bf16.mxu0 0
    %823 = vmatmul.mubr.bf16.gmra.mrb[0].mxu0 %v683
    %v824 = vpop.f32.mrb[0].mxu0
    %v825 = vadd.f32 0.0, %v824
    %v826 = vpop.f32.mrb[0].mxu0
    %v827 = vpop.f32.mrb[0].mxu0
    %v828 = vadd.f32 0.0, %v827
    %v829 = vpop.f32.mrb[0].mxu0
    %830 = vmatprep.mubr.bf16.mxu0 0
    %831 = vmatmul.mubr.bf16.gmra.mrb[0].mxu0 %v686
    %v832 = vpop.f32.mrb[0].mxu0
    %v833 = vadd.f32 0.0, %v832
    %v834 = vpop.f32.mrb[0].mxu0
    %v835 = vpop.f32.mrb[0].mxu0
    %v836 = vadd.f32 0.0, %v835
    %v837 = vpop.f32.mrb[0].mxu0
    %838 = vmatprep.mubr.bf16.mxu0 0
    %839 = vmatmul.mubr.bf16.gmra.mrb[0].mxu0 %v689
    %v840 = vpop.f32.mrb[0].mxu0
    %v841 = vadd.f32 0.0, %v840
    %v842 = vpop.f32.mrb[0].mxu0
    %v843 = vpop.f32.mrb[0].mxu0
    %v844 = vadd.f32 0.0, %v843
    %v845 = vpop.f32.mrb[0].mxu0
    %846 = vmatprep.mubr.bf16.mxu0 0
    %847 = vmatmul.mubr.bf16.gmra.mrb[0].mxu0 %v692
    %v848 = vpop.f32.mrb[0].mxu0
    %v849 = vadd.f32 0.0, %v848
    %v850 = vpop.f32.mrb[0].mxu0
    %v851 = vpop.f32.mrb[0].mxu0
    %v852 = vadd.f32 0.0, %v851
    %v853 = vpop.f32.mrb[0].mxu0
    %854 = vdwg.mxu0
    %v855 = vadd.f32 %v463, %v729
    %v856 = vadd.f32 %v466, %v732
    %v857 = vadd.f32 %v471, %v737
    %v858 = vadd.f32 %v474, %v740
    %v859 = vadd.f32 %v479, %v745
    %v860 = vadd.f32 %v482, %v748
    %v861 = vadd.f32 %v487, %v753
    %v862 = vadd.f32 %v490, %v756
    %v863 = vadd.f32 %v495, %v761
    %v864 = vadd.f32 %v498, %v764
    %v865 = vadd.f32 %v503, %v769
    %v866 = vadd.f32 %v506, %v772
    %v867 = vadd.f32 %v511, %v777
    %v868 = vadd.f32 %v514, %v780
    %v869 = vadd.f32 %v519, %v785
    %v870 = vadd.f32 %v522, %v788
    %v871 = vadd.f32 %v527, %v793
    %v872 = vadd.f32 %v530, %v796
    %v873 = vadd.f32 %v535, %v801
    %v874 = vadd.f32 %v538, %v804
    %v875 = vadd.f32 %v543, %v809
    %v876 = vadd.f32 %v546, %v812
    %v877 = vadd.f32 %v551, %v817
    %v878 = vadd.f32 %v554, %v820
    %v879 = vadd.f32 %v559, %v825
    %v880 = vadd.f32 %v562, %v828
    %v881 = vadd.f32 %v567, %v833
    %v882 = vadd.f32 %v570, %v836
    %v883 = vadd.f32 %v575, %v841
    %v884 = vadd.f32 %v578, %v844
    %v885 = vadd.f32 %v583, %v849
    %v886 = vadd.f32 %v586, %v852
    %v887 = vld [vmem:[%s6] sm:$0x1]
    %v889 = vlaneseq
    %v890 = vshrl.u32 %v889, 7
    %v891 = vsub.s32 0, %v890
    %v892 = vrot.slane %v887, %v891
    %v894 = vadd.f32 %v855, %v892
    %v895 = vadd.f32 %v856, %v892
    %v896 = vadd.f32 %v857, %v892
    %v897 = vadd.f32 %v858, %v892
    %v898 = vadd.f32 %v859, %v892
    %v899 = vadd.f32 %v860, %v892
    %v900 = vadd.f32 %v861, %v892
    %v901 = vadd.f32 %v862, %v892
    %v902 = vadd.f32 %v863, %v892
    %v903 = vadd.f32 %v864, %v892
    %v904 = vadd.f32 %v865, %v892
    %v905 = vadd.f32 %v866, %v892
    %v906 = vadd.f32 %v867, %v892
    %v907 = vadd.f32 %v868, %v892
    %v908 = vadd.f32 %v869, %v892
    %v909 = vadd.f32 %v870, %v892
    %v910 = vadd.f32 %v871, %v892
    %v911 = vadd.f32 %v872, %v892
    %v912 = vadd.f32 %v873, %v892
    %v913 = vadd.f32 %v874, %v892
    %v914 = vadd.f32 %v875, %v892
    %v915 = vadd.f32 %v876, %v892
    %v916 = vadd.f32 %v877, %v892
    %v917 = vadd.f32 %v878, %v892
    %v918 = vadd.f32 %v879, %v892
    %v919 = vadd.f32 %v880, %v892
    %v920 = vadd.f32 %v881, %v892
    %v921 = vadd.f32 %v882, %v892
    %v922 = vadd.f32 %v883, %v892
    %v923 = vadd.f32 %v884, %v892
    %v924 = vadd.f32 %v885, %v892
    %v925 = vadd.f32 %v886, %v892
    %v926 = vmax.f32 %v894, 0.0
    %v927 = vmax.f32 %v895, 0.0
    %v928 = vmax.f32 %v896, 0.0
    %v929 = vmax.f32 %v897, 0.0
    %v930 = vmax.f32 %v898, 0.0
    %v931 = vmax.f32 %v899, 0.0
    %v932 = vmax.f32 %v900, 0.0
    %v933 = vmax.f32 %v901, 0.0
    %v934 = vmax.f32 %v902, 0.0
    %v935 = vmax.f32 %v903, 0.0
    %v936 = vmax.f32 %v904, 0.0
    %v937 = vmax.f32 %v905, 0.0
    %v938 = vmax.f32 %v906, 0.0
    %v939 = vmax.f32 %v907, 0.0
    %v940 = vmax.f32 %v908, 0.0
    %v941 = vmax.f32 %v909, 0.0
    %v942 = vmax.f32 %v910, 0.0
    %v943 = vmax.f32 %v911, 0.0
    %v944 = vmax.f32 %v912, 0.0
    %v945 = vmax.f32 %v913, 0.0
    %v946 = vmax.f32 %v914, 0.0
    %v947 = vmax.f32 %v915, 0.0
    %v948 = vmax.f32 %v916, 0.0
    %v949 = vmax.f32 %v917, 0.0
    %v950 = vmax.f32 %v918, 0.0
    %v951 = vmax.f32 %v919, 0.0
    %v952 = vmax.f32 %v920, 0.0
    %v953 = vmax.f32 %v921, 0.0
    %v954 = vmax.f32 %v922, 0.0
    %v955 = vmax.f32 %v923, 0.0
    %v956 = vmax.f32 %v924, 0.0
    %v957 = vmax.f32 %v925, 0.0
    %v958 = vpack.c.bf16 %v927, %v926
    %v959 = vpack.c.bf16 %v929, %v928
    %v960 = vpack.c.bf16 %v931, %v930
    %v961 = vpack.c.bf16 %v933, %v932
    %v962 = vpack.c.bf16 %v935, %v934
    %v963 = vpack.c.bf16 %v937, %v936
    %v964 = vpack.c.bf16 %v939, %v938
    %v965 = vpack.c.bf16 %v941, %v940
    %v966 = vpack.c.bf16 %v943, %v942
    %v967 = vpack.c.bf16 %v945, %v944
    %v968 = vpack.c.bf16 %v947, %v946
    %v969 = vpack.c.bf16 %v949, %v948
    %v970 = vpack.c.bf16 %v951, %v950
    %v971 = vpack.c.bf16 %v953, %v952
    %v972 = vpack.c.bf16 %v955, %v954
    %v973 = vpack.c.bf16 %v957, %v956
    %v974 = vld [vmem:[%s7] sm:$0xf]
    %v975 = vld [vmem:[%s7 + $0x4] sm:$0xf]
    %v976 = vld [vmem:[%s7 + $0x8] sm:$0xf]
    %v977 = vld [vmem:[%s7 + $0xc] sm:$0xf]
    %v978 = vld [vmem:[%s7 + $0x10] sm:$0xf]
    %v979 = vld [vmem:[%s7 + $0x14] sm:$0xf]
    %v980 = vld [vmem:[%s7 + $0x18] sm:$0xf]
    %v981 = vld [vmem:[%s7 + $0x1c] sm:$0xf]
    %v982 = vld [vmem:[%s7 + $0x20] sm:$0xf]
    %v983 = vld [vmem:[%s7 + $0x24] sm:$0xf]
    %v984 = vld [vmem:[%s7 + $0x28] sm:$0xf]
    %v985 = vld [vmem:[%s7 + $0x2c] sm:$0xf]
    %v986 = vld [vmem:[%s7 + $0x30] sm:$0xf]
    %v987 = vld [vmem:[%s7 + $0x34] sm:$0xf]
    %v988 = vld [vmem:[%s7 + $0x38] sm:$0xf]
    %v989 = vld [vmem:[%s7 + $0x3c] sm:$0xf]
    %v990 = vld [vmem:[%s8] sm:$0x1]
    %v992 = vlaneseq
    %v993 = vshrl.u32 %v992, 7
    %v994 = vsub.s32 0, %v993
    %v995 = vrot.slane %v990, %v994
    %v1013 = vunpack.c.l.b16 %v974
    %v1014 = vunpack.c.l.b16 %v975
    %v1015 = vunpack.c.l.b16 %v976
    %v1016 = vunpack.c.l.b16 %v977
    %v1017 = vunpack.c.l.b16 %v978
    %v1018 = vunpack.c.l.b16 %v979
    %v1019 = vunpack.c.l.b16 %v980
    %v1020 = vunpack.c.l.b16 %v981
    %v1021 = vunpack.c.l.b16 %v982
    %v1022 = vunpack.c.l.b16 %v983
    %v1023 = vunpack.c.l.b16 %v984
    %v1024 = vunpack.c.l.b16 %v985
    %v1025 = vunpack.c.l.b16 %v986
    %v1026 = vunpack.c.l.b16 %v987
    %v1027 = vunpack.c.l.b16 %v988
    %v1028 = vunpack.c.l.b16 %v989
    %v1029 = vpack.c.b16 %v1014, %v1013
    %v1030 = vpack.c.b16 %v1016, %v1015
    %v1031 = vpack.c.b16 %v1018, %v1017
    %v1032 = vpack.c.b16 %v1020, %v1019
    %v1033 = vpack.c.b16 %v1022, %v1021
    %v1034 = vpack.c.b16 %v1024, %v1023
    %v1035 = vpack.c.b16 %v1026, %v1025
    %v1036 = vpack.c.b16 %v1028, %v1027
    %1045 = vmatprep.subr.bf16.mxu0 0
    %1046 = vmatpush1.bf16.msra.mxu0 %v1029
    %1047 = vmatprep.subr.bf16.mxu0 0
    %1048 = vmatpush1.bf16.msra.mxu0 %v1030
    %1049 = vmatprep.subr.bf16.mxu0 0
    %1050 = vmatpush1.bf16.msra.mxu0 %v1031
    %1051 = vmatprep.subr.bf16.mxu0 0
    %1052 = vmatpush1.bf16.msra.mxu0 %v1032
    %1053 = vmatprep.subr.bf16.mxu0 0
    %1054 = vmatpush1.bf16.msra.mxu0 %v1033
    %1055 = vmatprep.subr.bf16.mxu0 0
    %1056 = vmatpush1.bf16.msra.mxu0 %v1034
    %1057 = vmatprep.subr.bf16.mxu0 0
    %1058 = vmatpush1.bf16.msra.mxu0 %v1035
    %1059 = vmatprep.subr.bf16.mxu0 0
    %1060 = vmatpush1.bf16.msra.mxu0 %v1036
    %1061 = vmatprep.subr.bf16.mxu0 0
    %1062 = vmatpush1.bf16.msra.mxu0 0
    %1063 = vmatprep.subr.bf16.mxu0 0
    %1064 = vmatpush1.bf16.msra.mxu0 0
    %1065 = vmatprep.subr.bf16.mxu0 0
    %1066 = vmatpush1.bf16.msra.mxu0 0
    %1067 = vmatprep.subr.bf16.mxu0 0
    %1068 = vmatpush1.bf16.msra.mxu0 0
    %1069 = vmatprep.subr.bf16.mxu0 0
    %1070 = vmatpush1.bf16.msra.mxu0 0
    %1071 = vmatprep.subr.bf16.mxu0 0
    %1072 = vmatpush1.bf16.msra.mxu0 0
    %1073 = vmatprep.subr.bf16.mxu0 0
    %1074 = vmatpush1.bf16.msra.mxu0 0
    %1075 = vmatprep.subr.bf16.mxu0 0
    %1076 = vmatpush1.bf16.msra.mxu0 0
    %1077 = vmatprep.mubr.bf16.mxu0 0
    %1078 = vmatmul.mubr.bf16.gmra.mrb[0].mxu0 %v958
    %v1079 = vpop.f32.mrb[0].mxu0
    %v1080 = vadd.f32 %v995, %v1079
    %v1081 = vpop.f32.mrb[0].mxu0
    %v1082 = vpop.f32.mrb[0].mxu0
    %v1083 = vadd.f32 %v995, %v1082
    %v1084 = vpop.f32.mrb[0].mxu0
    %1085 = vmatprep.mubr.bf16.mxu0 0
    %1086 = vmatmul.mubr.bf16.gmra.mrb[0].mxu0 %v959
    %v1087 = vpop.f32.mrb[0].mxu0
    %v1088 = vadd.f32 %v995, %v1087
    %v1089 = vpop.f32.mrb[0].mxu0
    %v1090 = vpop.f32.mrb[0].mxu0
    %v1091 = vadd.f32 %v995, %v1090
    %v1092 = vpop.f32.mrb[0].mxu0
    %1093 = vmatprep.mubr.bf16.mxu0 0
    %1094 = vmatmul.mubr.bf16.gmra.mrb[0].mxu0 %v960
    %v1095 = vpop.f32.mrb[0].mxu0
    %v1096 = vadd.f32 %v995, %v1095
    %v1097 = vpop.f32.mrb[0].mxu0
    %v1098 = vpop.f32.mrb[0].mxu0
    %v1099 = vadd.f32 %v995, %v1098
    %v1100 = vpop.f32.mrb[0].mxu0
    %1101 = vmatprep.mubr.bf16.mxu0 0
    %1102 = vmatmul.mubr.bf16.gmra.mrb[0].mxu0 %v961
    %v1103 = vpop.f32.mrb[0].mxu0
    %v1104 = vadd.f32 %v995, %v1103
    %v1105 = vpop.f32.mrb[0].mxu0
    %v1106 = vpop.f32.mrb[0].mxu0
    %v1107 = vadd.f32 %v995, %v1106
    %v1108 = vpop.f32.mrb[0].mxu0
    %1109 = vmatprep.mubr.bf16.mxu0 0
    %1110 = vmatmul.mubr.bf16.gmra.mrb[0].mxu0 %v962
    %v1111 = vpop.f32.mrb[0].mxu0
    %v1112 = vadd.f32 %v995, %v1111
    %v1113 = vpop.f32.mrb[0].mxu0
    %v1114 = vpop.f32.mrb[0].mxu0
    %v1115 = vadd.f32 %v995, %v1114
    %v1116 = vpop.f32.mrb[0].mxu0
    %1117 = vmatprep.mubr.bf16.mxu0 0
    %1118 = vmatmul.mubr.bf16.gmra.mrb[0].mxu0 %v963
    %v1119 = vpop.f32.mrb[0].mxu0
    %v1120 = vadd.f32 %v995, %v1119
    %v1121 = vpop.f32.mrb[0].mxu0
    %v1122 = vpop.f32.mrb[0].mxu0
    %v1123 = vadd.f32 %v995, %v1122
    %v1124 = vpop.f32.mrb[0].mxu0
    %1125 = vmatprep.mubr.bf16.mxu0 0
    %1126 = vmatmul.mubr.bf16.gmra.mrb[0].mxu0 %v964
    %v1127 = vpop.f32.mrb[0].mxu0
    %v1128 = vadd.f32 %v995, %v1127
    %v1129 = vpop.f32.mrb[0].mxu0
    %v1130 = vpop.f32.mrb[0].mxu0
    %v1131 = vadd.f32 %v995, %v1130
    %v1132 = vpop.f32.mrb[0].mxu0
    %1133 = vmatprep.mubr.bf16.mxu0 0
    %1134 = vmatmul.mubr.bf16.gmra.mrb[0].mxu0 %v965
    %v1135 = vpop.f32.mrb[0].mxu0
    %v1136 = vadd.f32 %v995, %v1135
    %v1137 = vpop.f32.mrb[0].mxu0
    %v1138 = vpop.f32.mrb[0].mxu0
    %v1139 = vadd.f32 %v995, %v1138
    %v1140 = vpop.f32.mrb[0].mxu0
    %1141 = vmatprep.mubr.bf16.mxu0 0
    %1142 = vmatmul.mubr.bf16.gmra.mrb[0].mxu0 %v966
    %v1143 = vpop.f32.mrb[0].mxu0
    %v1144 = vadd.f32 %v995, %v1143
    %v1145 = vpop.f32.mrb[0].mxu0
    %v1146 = vpop.f32.mrb[0].mxu0
    %v1147 = vadd.f32 %v995, %v1146
    %v1148 = vpop.f32.mrb[0].mxu0
    %1149 = vmatprep.mubr.bf16.mxu0 0
    %1150 = vmatmul.mubr.bf16.gmra.mrb[0].mxu0 %v967
    %v1151 = vpop.f32.mrb[0].mxu0
    %v1152 = vadd.f32 %v995, %v1151
    %v1153 = vpop.f32.mrb[0].mxu0
    %v1154 = vpop.f32.mrb[0].mxu0
    %v1155 = vadd.f32 %v995, %v1154
    %v1156 = vpop.f32.mrb[0].mxu0
    %1157 = vmatprep.mubr.bf16.mxu0 0
    %1158 = vmatmul.mubr.bf16.gmra.mrb[0].mxu0 %v968
    %v1159 = vpop.f32.mrb[0].mxu0
    %v1160 = vadd.f32 %v995, %v1159
    %v1161 = vpop.f32.mrb[0].mxu0
    %v1162 = vpop.f32.mrb[0].mxu0
    %v1163 = vadd.f32 %v995, %v1162
    %v1164 = vpop.f32.mrb[0].mxu0
    %1165 = vmatprep.mubr.bf16.mxu0 0
    %1166 = vmatmul.mubr.bf16.gmra.mrb[0].mxu0 %v969
    %v1167 = vpop.f32.mrb[0].mxu0
    %v1168 = vadd.f32 %v995, %v1167
    %v1169 = vpop.f32.mrb[0].mxu0
    %v1170 = vpop.f32.mrb[0].mxu0
    %v1171 = vadd.f32 %v995, %v1170
    %v1172 = vpop.f32.mrb[0].mxu0
    %1173 = vmatprep.mubr.bf16.mxu0 0
    %1174 = vmatmul.mubr.bf16.gmra.mrb[0].mxu0 %v970
    %v1175 = vpop.f32.mrb[0].mxu0
    %v1176 = vadd.f32 %v995, %v1175
    %v1177 = vpop.f32.mrb[0].mxu0
    %v1178 = vpop.f32.mrb[0].mxu0
    %v1179 = vadd.f32 %v995, %v1178
    %v1180 = vpop.f32.mrb[0].mxu0
    %1181 = vmatprep.mubr.bf16.mxu0 0
    %1182 = vmatmul.mubr.bf16.gmra.mrb[0].mxu0 %v971
    %v1183 = vpop.f32.mrb[0].mxu0
    %v1184 = vadd.f32 %v995, %v1183
    %v1185 = vpop.f32.mrb[0].mxu0
    %v1186 = vpop.f32.mrb[0].mxu0
    %v1187 = vadd.f32 %v995, %v1186
    %v1188 = vpop.f32.mrb[0].mxu0
    %1189 = vmatprep.mubr.bf16.mxu0 0
    %1190 = vmatmul.mubr.bf16.gmra.mrb[0].mxu0 %v972
    %v1191 = vpop.f32.mrb[0].mxu0
    %v1192 = vadd.f32 %v995, %v1191
    %v1193 = vpop.f32.mrb[0].mxu0
    %v1194 = vpop.f32.mrb[0].mxu0
    %v1195 = vadd.f32 %v995, %v1194
    %v1196 = vpop.f32.mrb[0].mxu0
    %1197 = vmatprep.mubr.bf16.mxu0 0
    %1198 = vmatmul.mubr.bf16.gmra.mrb[0].mxu0 %v973
    %v1199 = vpop.f32.mrb[0].mxu0
    %v1200 = vadd.f32 %v995, %v1199
    %v1201 = vpop.f32.mrb[0].mxu0
    %v1202 = vpop.f32.mrb[0].mxu0
    %v1203 = vadd.f32 %v995, %v1202
    %v1204 = vpop.f32.mrb[0].mxu0
    %1205 = vdwg.mxu0
    %v1206 = vmax.f32 %v1080, 0.0
    %v1207 = vmax.f32 %v1083, 0.0
    %v1208 = vmax.f32 %v1088, 0.0
    %v1209 = vmax.f32 %v1091, 0.0
    %v1210 = vmax.f32 %v1096, 0.0
    %v1211 = vmax.f32 %v1099, 0.0
    %v1212 = vmax.f32 %v1104, 0.0
    %v1213 = vmax.f32 %v1107, 0.0
    %v1214 = vmax.f32 %v1112, 0.0
    %v1215 = vmax.f32 %v1115, 0.0
    %v1216 = vmax.f32 %v1120, 0.0
    %v1217 = vmax.f32 %v1123, 0.0
    %v1218 = vmax.f32 %v1128, 0.0
    %v1219 = vmax.f32 %v1131, 0.0
    %v1220 = vmax.f32 %v1136, 0.0
    %v1221 = vmax.f32 %v1139, 0.0
    %v1222 = vmax.f32 %v1144, 0.0
    %v1223 = vmax.f32 %v1147, 0.0
    %v1224 = vmax.f32 %v1152, 0.0
    %v1225 = vmax.f32 %v1155, 0.0
    %v1226 = vmax.f32 %v1160, 0.0
    %v1227 = vmax.f32 %v1163, 0.0
    %v1228 = vmax.f32 %v1168, 0.0
    %v1229 = vmax.f32 %v1171, 0.0
    %v1230 = vmax.f32 %v1176, 0.0
    %v1231 = vmax.f32 %v1179, 0.0
    %v1232 = vmax.f32 %v1184, 0.0
    %v1233 = vmax.f32 %v1187, 0.0
    %v1234 = vmax.f32 %v1192, 0.0
    %v1235 = vmax.f32 %v1195, 0.0
    %v1236 = vmax.f32 %v1200, 0.0
    %v1237 = vmax.f32 %v1203, 0.0
    %v1238 = vld [vmem:[%s9] sm:$0x1]
    %v1240 = vlaneseq
    %v1241 = vshrl.u32 %v1240, 7
    %v1242 = vsub.s32 0, %v1241
    %v1243 = vrot.slane %v1238, %v1242
    %v1245 = vmul.f32 %v1206, %v1243
    %v1246 = vmul.f32 %v1207, %v1243
    %v1247 = vmul.f32 %v1208, %v1243
    %v1248 = vmul.f32 %v1209, %v1243
    %v1249 = vmul.f32 %v1210, %v1243
    %v1250 = vmul.f32 %v1211, %v1243
    %v1251 = vmul.f32 %v1212, %v1243
    %v1252 = vmul.f32 %v1213, %v1243
    %v1253 = vmul.f32 %v1214, %v1243
    %v1254 = vmul.f32 %v1215, %v1243
    %v1255 = vmul.f32 %v1216, %v1243
    %v1256 = vmul.f32 %v1217, %v1243
    %v1257 = vmul.f32 %v1218, %v1243
    %v1258 = vmul.f32 %v1219, %v1243
    %v1259 = vmul.f32 %v1220, %v1243
    %v1260 = vmul.f32 %v1221, %v1243
    %v1261 = vmul.f32 %v1222, %v1243
    %v1262 = vmul.f32 %v1223, %v1243
    %v1263 = vmul.f32 %v1224, %v1243
    %v1264 = vmul.f32 %v1225, %v1243
    %v1265 = vmul.f32 %v1226, %v1243
    %v1266 = vmul.f32 %v1227, %v1243
    %v1267 = vmul.f32 %v1228, %v1243
    %v1268 = vmul.f32 %v1229, %v1243
    %v1269 = vmul.f32 %v1230, %v1243
    %v1270 = vmul.f32 %v1231, %v1243
    %v1271 = vmul.f32 %v1232, %v1243
    %v1272 = vmul.f32 %v1233, %v1243
    %v1273 = vmul.f32 %v1234, %v1243
    %v1274 = vmul.f32 %v1235, %v1243
    %v1275 = vmul.f32 %v1236, %v1243
    %v1276 = vmul.f32 %v1237, %v1243
    %vm1277 = vcmask 523264
    %v1278 = vsel %vm1277, %v1245, 0.0
    %1279 = vadd.xlane.f32.xlu0 %v1278
    %v1280 = vpop.xlane.xlu0 %1279
    %v1281 = vsel %vm1277, %v1246, 0.0
    %1282 = vadd.xlane.f32.xlu0 %v1281
    %v1283 = vpop.xlane.xlu0 %1282
    %v1284 = vsel %vm1277, %v1247, 0.0
    %1285 = vadd.xlane.f32.xlu0 %v1284
    %v1286 = vpop.xlane.xlu0 %1285
    %v1287 = vsel %vm1277, %v1248, 0.0
    %1288 = vadd.xlane.f32.xlu0 %v1287
    %v1289 = vpop.xlane.xlu0 %1288
    %v1290 = vsel %vm1277, %v1249, 0.0
    %1291 = vadd.xlane.f32.xlu0 %v1290
    %v1292 = vpop.xlane.xlu0 %1291
    %v1293 = vsel %vm1277, %v1250, 0.0
    %1294 = vadd.xlane.f32.xlu0 %v1293
    %v1295 = vpop.xlane.xlu0 %1294
    %v1296 = vsel %vm1277, %v1251, 0.0
    %1297 = vadd.xlane.f32.xlu0 %v1296
    %v1298 = vpop.xlane.xlu0 %1297
    %v1299 = vsel %vm1277, %v1252, 0.0
    %1300 = vadd.xlane.f32.xlu0 %v1299
    %v1301 = vpop.xlane.xlu0 %1300
    %v1302 = vsel %vm1277, %v1253, 0.0
    %1303 = vadd.xlane.f32.xlu0 %v1302
    %v1304 = vpop.xlane.xlu0 %1303
    %v1305 = vsel %vm1277, %v1254, 0.0
    %1306 = vadd.xlane.f32.xlu0 %v1305
    %v1307 = vpop.xlane.xlu0 %1306
    %v1308 = vsel %vm1277, %v1255, 0.0
    %1309 = vadd.xlane.f32.xlu0 %v1308
    %v1310 = vpop.xlane.xlu0 %1309
    %v1311 = vsel %vm1277, %v1256, 0.0
    %1312 = vadd.xlane.f32.xlu0 %v1311
    %v1313 = vpop.xlane.xlu0 %1312
    %v1314 = vsel %vm1277, %v1257, 0.0
    %1315 = vadd.xlane.f32.xlu0 %v1314
    %v1316 = vpop.xlane.xlu0 %1315
    %v1317 = vsel %vm1277, %v1258, 0.0
    %1318 = vadd.xlane.f32.xlu0 %v1317
    %v1319 = vpop.xlane.xlu0 %1318
    %v1320 = vsel %vm1277, %v1259, 0.0
    %1321 = vadd.xlane.f32.xlu0 %v1320
    %v1322 = vpop.xlane.xlu0 %1321
    %v1323 = vsel %vm1277, %v1260, 0.0
    %1324 = vadd.xlane.f32.xlu0 %v1323
    %v1325 = vpop.xlane.xlu0 %1324
    %v1326 = vsel %vm1277, %v1261, 0.0
    %1327 = vadd.xlane.f32.xlu0 %v1326
    %v1328 = vpop.xlane.xlu0 %1327
    %v1329 = vsel %vm1277, %v1262, 0.0
    %1330 = vadd.xlane.f32.xlu0 %v1329
    %v1331 = vpop.xlane.xlu0 %1330
    %v1332 = vsel %vm1277, %v1263, 0.0
    %1333 = vadd.xlane.f32.xlu0 %v1332
    %v1334 = vpop.xlane.xlu0 %1333
    %v1335 = vsel %vm1277, %v1264, 0.0
    %1336 = vadd.xlane.f32.xlu0 %v1335
    %v1337 = vpop.xlane.xlu0 %1336
    %v1338 = vsel %vm1277, %v1265, 0.0
    %1339 = vadd.xlane.f32.xlu0 %v1338
    %v1340 = vpop.xlane.xlu0 %1339
    %v1341 = vsel %vm1277, %v1266, 0.0
    %1342 = vadd.xlane.f32.xlu0 %v1341
    %v1343 = vpop.xlane.xlu0 %1342
    %v1344 = vsel %vm1277, %v1267, 0.0
    %1345 = vadd.xlane.f32.xlu0 %v1344
    %v1346 = vpop.xlane.xlu0 %1345
    %v1347 = vsel %vm1277, %v1268, 0.0
    %1348 = vadd.xlane.f32.xlu0 %v1347
    %v1349 = vpop.xlane.xlu0 %1348
    %v1350 = vsel %vm1277, %v1269, 0.0
    %1351 = vadd.xlane.f32.xlu0 %v1350
    %v1352 = vpop.xlane.xlu0 %1351
    %v1353 = vsel %vm1277, %v1270, 0.0
    %1354 = vadd.xlane.f32.xlu0 %v1353
    %v1355 = vpop.xlane.xlu0 %1354
    %v1356 = vsel %vm1277, %v1271, 0.0
    %1357 = vadd.xlane.f32.xlu0 %v1356
    %v1358 = vpop.xlane.xlu0 %1357
    %v1359 = vsel %vm1277, %v1272, 0.0
    %1360 = vadd.xlane.f32.xlu0 %v1359
    %v1361 = vpop.xlane.xlu0 %1360
    %v1362 = vsel %vm1277, %v1273, 0.0
    %1363 = vadd.xlane.f32.xlu0 %v1362
    %v1364 = vpop.xlane.xlu0 %1363
    %v1365 = vsel %vm1277, %v1274, 0.0
    %1366 = vadd.xlane.f32.xlu0 %v1365
    %v1367 = vpop.xlane.xlu0 %1366
    %v1368 = vsel %vm1277, %v1275, 0.0
    %1369 = vadd.xlane.f32.xlu0 %v1368
    %v1370 = vpop.xlane.xlu0 %1369
    %v1371 = vsel %vm1277, %v1276, 0.0
    %1372 = vadd.xlane.f32.xlu0 %v1371
    %v1373 = vpop.xlane.xlu0 %1372
    %v1374 = vld [vmem:[#allocation2] sm:$0x1]
    %v1376 = vlaneseq
    %v1377 = vshrl.u32 %v1376, 7
    %v1378 = vsub.s32 0, %v1377
    %v1379 = vrot.slane %v1374, %v1378
    %1380 = vset.pattern.permute.xlu0 0
    %1381 = vperm.xlu0 %1380, %v1379
    %v1382 = vpop.permute.xlu0 %1381
    %v1384 = vadd.f32 %v1280, %v1382
    %v1385 = vadd.f32 %v1283, %v1382
    %v1386 = vadd.f32 %v1286, %v1382
    %v1387 = vadd.f32 %v1289, %v1382
    %v1388 = vadd.f32 %v1292, %v1382
    %v1389 = vadd.f32 %v1295, %v1382
    %v1390 = vadd.f32 %v1298, %v1382
    %v1391 = vadd.f32 %v1301, %v1382
    %v1392 = vadd.f32 %v1304, %v1382
    %v1393 = vadd.f32 %v1307, %v1382
    %v1394 = vadd.f32 %v1310, %v1382
    %v1395 = vadd.f32 %v1313, %v1382
    %v1396 = vadd.f32 %v1316, %v1382
    %v1397 = vadd.f32 %v1319, %v1382
    %v1398 = vadd.f32 %v1322, %v1382
    %v1399 = vadd.f32 %v1325, %v1382
    %v1400 = vadd.f32 %v1328, %v1382
    %v1401 = vadd.f32 %v1331, %v1382
    %v1402 = vadd.f32 %v1334, %v1382
    %v1403 = vadd.f32 %v1337, %v1382
    %v1404 = vadd.f32 %v1340, %v1382
    %v1405 = vadd.f32 %v1343, %v1382
    %v1406 = vadd.f32 %v1346, %v1382
    %v1407 = vadd.f32 %v1349, %v1382
    %v1408 = vadd.f32 %v1352, %v1382
    %v1409 = vadd.f32 %v1355, %v1382
    %v1410 = vadd.f32 %v1358, %v1382
    %v1411 = vadd.f32 %v1361, %v1382
    %v1412 = vadd.f32 %v1364, %v1382
    %v1413 = vadd.f32 %v1367, %v1382
    %v1414 = vadd.f32 %v1370, %v1382
    %v1415 = vadd.f32 %v1373, %v1382
    %v1416 = vxor.u32 %v1384, 2147483648
    %v1417 = vxor.u32 %v1385, 2147483648
    %v1418 = vxor.u32 %v1386, 2147483648
    %v1419 = vxor.u32 %v1387, 2147483648
    %v1420 = vxor.u32 %v1388, 2147483648
    %v1421 = vxor.u32 %v1389, 2147483648
    %v1422 = vxor.u32 %v1390, 2147483648
    %v1423 = vxor.u32 %v1391, 2147483648
    %v1424 = vxor.u32 %v1392, 2147483648
    %v1425 = vxor.u32 %v1393, 2147483648
    %v1426 = vxor.u32 %v1394, 2147483648
    %v1427 = vxor.u32 %v1395, 2147483648
    %v1428 = vxor.u32 %v1396, 2147483648
    %v1429 = vxor.u32 %v1397, 2147483648
    %v1430 = vxor.u32 %v1398, 2147483648
    %v1431 = vxor.u32 %v1399, 2147483648
    %v1432 = vxor.u32 %v1400, 2147483648
    %v1433 = vxor.u32 %v1401, 2147483648
    %v1434 = vxor.u32 %v1402, 2147483648
    %v1435 = vxor.u32 %v1403, 2147483648
    %v1436 = vxor.u32 %v1404, 2147483648
    %v1437 = vxor.u32 %v1405, 2147483648
    %v1438 = vxor.u32 %v1406, 2147483648
    %v1439 = vxor.u32 %v1407, 2147483648
    %v1440 = vxor.u32 %v1408, 2147483648
    %v1441 = vxor.u32 %v1409, 2147483648
    %v1442 = vxor.u32 %v1410, 2147483648
    %v1443 = vxor.u32 %v1411, 2147483648
    %v1444 = vxor.u32 %v1412, 2147483648
    %v1445 = vxor.u32 %v1413, 2147483648
    %v1446 = vxor.u32 %v1414, 2147483648
    %v1447 = vxor.u32 %v1415, 2147483648
    %v1448 = vmul.f32 %v1416, 1.442695
    %v1449 = vpow.pop %v1448
    %v1450 = vmul.f32 %v1417, 1.442695
    %v1451 = vpow.pop %v1450
    %v1452 = vmul.f32 %v1418, 1.442695
    %v1453 = vpow.pop %v1452
    %v1454 = vmul.f32 %v1419, 1.442695
    %v1455 = vpow.pop %v1454
    %v1456 = vmul.f32 %v1420, 1.442695
    %v1457 = vpow.pop %v1456
    %v1458 = vmul.f32 %v1421, 1.442695
    %v1459 = vpow.pop %v1458
    %v1460 = vmul.f32 %v1422, 1.442695
    %v1461 = vpow.pop %v1460
    %v1462 = vmul.f32 %v1423, 1.442695
    %v1463 = vpow.pop %v1462
    %v1464 = vmul.f32 %v1424, 1.442695
    %v1465 = vpow.pop %v1464
    %v1466 = vmul.f32 %v1425, 1.442695
    %v1467 = vpow.pop %v1466
    %v1468 = vmul.f32 %v1426, 1.442695
    %v1469 = vpow.pop %v1468
    %v1470 = vmul.f32 %v1427, 1.442695
    %v1471 = vpow.pop %v1470
    %v1472 = vmul.f32 %v1428, 1.442695
    %v1473 = vpow.pop %v1472
    %v1474 = vmul.f32 %v1429, 1.442695
    %v1475 = vpow.pop %v1474
    %v1476 = vmul.f32 %v1430, 1.442695
    %v1477 = vpow.pop %v1476
    %v1478 = vmul.f32 %v1431, 1.442695
    %v1479 = vpow.pop %v1478
    %v1480 = vmul.f32 %v1432, 1.442695
    %v1481 = vpow.pop %v1480
    %v1482 = vmul.f32 %v1433, 1.442695
    %v1483 = vpow.pop %v1482
    %v1484 = vmul.f32 %v1434, 1.442695
    %v1485 = vpow.pop %v1484
    %v1486 = vmul.f32 %v1435, 1.442695
    %v1487 = vpow.pop %v1486
    %v1488 = vmul.f32 %v1436, 1.442695
    %v1489 = vpow.pop %v1488
    %v1490 = vmul.f32 %v1437, 1.442695
    %v1491 = vpow.pop %v1490
    %v1492 = vmul.f32 %v1438, 1.442695
    %v1493 = vpow.pop %v1492
    %v1494 = vmul.f32 %v1439, 1.442695
    %v1495 = vpow.pop %v1494
    %v1496 = vmul.f32 %v1440, 1.442695
    %v1497 = vpow.pop %v1496
    %v1498 = vmul.f32 %v1441, 1.442695
    %v1499 = vpow.pop %v1498
    %v1500 = vmul.f32 %v1442, 1.442695
    %v1501 = vpow.pop %v1500
    %v1502 = vmul.f32 %v1443, 1.442695
    %v1503 = vpow.pop %v1502
    %v1504 = vmul.f32 %v1444, 1.442695
    %v1505 = vpow.pop %v1504
    %v1506 = vmul.f32 %v1445, 1.442695
    %v1507 = vpow.pop %v1506
    %v1508 = vmul.f32 %v1446, 1.442695
    %v1509 = vpow.pop %v1508
    %v1510 = vmul.f32 %v1447, 1.442695
    %v1511 = vpow.pop %v1510
    %v1512 = vadd.f32 %v1449, 1.0
    %v1513 = vadd.f32 %v1451, 1.0
    %v1514 = vadd.f32 %v1453, 1.0
    %v1515 = vadd.f32 %v1455, 1.0
    %v1516 = vadd.f32 %v1457, 1.0
    %v1517 = vadd.f32 %v1459, 1.0
    %v1518 = vadd.f32 %v1461, 1.0
    %v1519 = vadd.f32 %v1463, 1.0
    %v1520 = vadd.f32 %v1465, 1.0
    %v1521 = vadd.f32 %v1467, 1.0
    %v1522 = vadd.f32 %v1469, 1.0
    %v1523 = vadd.f32 %v1471, 1.0
    %v1524 = vadd.f32 %v1473, 1.0
    %v1525 = vadd.f32 %v1475, 1.0
    %v1526 = vadd.f32 %v1477, 1.0
    %v1527 = vadd.f32 %v1479, 1.0
    %v1528 = vadd.f32 %v1481, 1.0
    %v1529 = vadd.f32 %v1483, 1.0
    %v1530 = vadd.f32 %v1485, 1.0
    %v1531 = vadd.f32 %v1487, 1.0
    %v1532 = vadd.f32 %v1489, 1.0
    %v1533 = vadd.f32 %v1491, 1.0
    %v1534 = vadd.f32 %v1493, 1.0
    %v1535 = vadd.f32 %v1495, 1.0
    %v1536 = vadd.f32 %v1497, 1.0
    %v1537 = vadd.f32 %v1499, 1.0
    %v1538 = vadd.f32 %v1501, 1.0
    %v1539 = vadd.f32 %v1503, 1.0
    %v1540 = vadd.f32 %v1505, 1.0
    %v1541 = vadd.f32 %v1507, 1.0
    %v1542 = vadd.f32 %v1509, 1.0
    %v1543 = vadd.f32 %v1511, 1.0
    %v1544 = vrcp.pop %v1512
    %v1545 = vmul.f32 1.0, %v1544
    %v1546 = vrcp.pop %v1513
    %v1547 = vmul.f32 1.0, %v1546
    %v1548 = vrcp.pop %v1514
    %v1549 = vmul.f32 1.0, %v1548
    %v1550 = vrcp.pop %v1515
    %v1551 = vmul.f32 1.0, %v1550
    %v1552 = vrcp.pop %v1516
    %v1553 = vmul.f32 1.0, %v1552
    %v1554 = vrcp.pop %v1517
    %v1555 = vmul.f32 1.0, %v1554
    %v1556 = vrcp.pop %v1518
    %v1557 = vmul.f32 1.0, %v1556
    %v1558 = vrcp.pop %v1519
    %v1559 = vmul.f32 1.0, %v1558
    %v1560 = vrcp.pop %v1520
    %v1561 = vmul.f32 1.0, %v1560
    %v1562 = vrcp.pop %v1521
    %v1563 = vmul.f32 1.0, %v1562
    %v1564 = vrcp.pop %v1522
    %v1565 = vmul.f32 1.0, %v1564
    %v1566 = vrcp.pop %v1523
    %v1567 = vmul.f32 1.0, %v1566
    %v1568 = vrcp.pop %v1524
    %v1569 = vmul.f32 1.0, %v1568
    %v1570 = vrcp.pop %v1525
    %v1571 = vmul.f32 1.0, %v1570
    %v1572 = vrcp.pop %v1526
    %v1573 = vmul.f32 1.0, %v1572
    %v1574 = vrcp.pop %v1527
    %v1575 = vmul.f32 1.0, %v1574
    %v1576 = vrcp.pop %v1528
    %v1577 = vmul.f32 1.0, %v1576
    %v1578 = vrcp.pop %v1529
    %v1579 = vmul.f32 1.0, %v1578
    %v1580 = vrcp.pop %v1530
    %v1581 = vmul.f32 1.0, %v1580
    %v1582 = vrcp.pop %v1531
    %v1583 = vmul.f32 1.0, %v1582
    %v1584 = vrcp.pop %v1532
    %v1585 = vmul.f32 1.0, %v1584
    %v1586 = vrcp.pop %v1533
    %v1587 = vmul.f32 1.0, %v1586
    %v1588 = vrcp.pop %v1534
    %v1589 = vmul.f32 1.0, %v1588
    %v1590 = vrcp.pop %v1535
    %v1591 = vmul.f32 1.0, %v1590
    %v1592 = vrcp.pop %v1536
    %v1593 = vmul.f32 1.0, %v1592
    %v1594 = vrcp.pop %v1537
    %v1595 = vmul.f32 1.0, %v1594
    %v1596 = vrcp.pop %v1538
    %v1597 = vmul.f32 1.0, %v1596
    %v1598 = vrcp.pop %v1539
    %v1599 = vmul.f32 1.0, %v1598
    %v1600 = vrcp.pop %v1540
    %v1601 = vmul.f32 1.0, %v1600
    %v1602 = vrcp.pop %v1541
    %v1603 = vmul.f32 1.0, %v1602
    %v1604 = vrcp.pop %v1542
    %v1605 = vmul.f32 1.0, %v1604
    %v1606 = vrcp.pop %v1543
    %v1607 = vmul.f32 1.0, %v1606
    %v1640 = vlaneseq
    %v1641 = vand.u32 %v1640, 127
    %v1642 = vlaneseq
    %v1643 = vshrl.u32 %v1642, 7
    %v1644 = vsub.s32 %v1641, %v1643
    %v1645 = vrot.slane %v1545, %v1644
    %v1646 = vadd.s32 %v1641, 4294967288
    %v1647 = vlaneseq
    %v1648 = vshrl.u32 %v1647, 7
    %v1649 = vsub.s32 %v1646, %v1648
    %v1650 = vrot.slane %v1547, %v1649
    %vm1651 = vcmask 130112
    %v1652 = vsel %vm1651, %v1650, %v1645
    %v1653 = vadd.s32 %v1641, 4294967280
    %v1654 = vlaneseq
    %v1655 = vshrl.u32 %v1654, 7
    %v1656 = vsub.s32 %v1653, %v1655
    %v1657 = vrot.slane %v1549, %v1656
    %vm1658 = vcmask 195712
    %v1659 = vsel %vm1658, %v1657, %v1652
    %v1660 = vadd.s32 %v1641, 4294967272
    %v1661 = vlaneseq
    %v1662 = vshrl.u32 %v1661, 7
    %v1663 = vsub.s32 %v1660, %v1662
    %v1664 = vrot.slane %v1551, %v1663
    %vm1665 = vcmask 261312
    %v1666 = vsel %vm1665, %v1664, %v1659
    %v1667 = vadd.s32 %v1641, 4294967264
    %v1668 = vlaneseq
    %v1669 = vshrl.u32 %v1668, 7
    %v1670 = vsub.s32 %v1667, %v1669
    %v1671 = vrot.slane %v1553, %v1670
    %vm1672 = vcmask 326912
    %v1673 = vsel %vm1672, %v1671, %v1666
    %v1674 = vadd.s32 %v1641, 4294967256
    %v1675 = vlaneseq
    %v1676 = vshrl.u32 %v1675, 7
    %v1677 = vsub.s32 %v1674, %v1676
    %v1678 = vrot.slane %v1555, %v1677
    %vm1679 = vcmask 392512
    %v1680 = vsel %vm1679, %v1678, %v1673
    %v1681 = vadd.s32 %v1641, 4294967248
    %v1682 = vlaneseq
    %v1683 = vshrl.u32 %v1682, 7
    %v1684 = vsub.s32 %v1681, %v1683
    %v1685 = vrot.slane %v1557, %v1684
    %vm1686 = vcmask 458112
    %v1687 = vsel %vm1686, %v1685, %v1680
    %v1688 = vadd.s32 %v1641, 4294967240
    %v1689 = vlaneseq
    %v1690 = vshrl.u32 %v1689, 7
    %v1691 = vsub.s32 %v1688, %v1690
    %v1692 = vrot.slane %v1559, %v1691
    %vm1693 = vcmask 523712
    %v1694 = vsel %vm1693, %v1692, %v1687
    %v1695 = vadd.s32 %v1641, 4294967232
    %v1696 = vlaneseq
    %v1697 = vshrl.u32 %v1696, 7
    %v1698 = vsub.s32 %v1695, %v1697
    %v1699 = vrot.slane %v1561, %v1698
    %vm1700 = vcmask 589312
    %v1701 = vsel %vm1700, %v1699, %v1694
    %v1702 = vadd.s32 %v1641, 4294967224
    %v1703 = vlaneseq
    %v1704 = vshrl.u32 %v1703, 7
    %v1705 = vsub.s32 %v1702, %v1704
    %v1706 = vrot.slane %v1563, %v1705
    %vm1707 = vcmask 654912
    %v1708 = vsel %vm1707, %v1706, %v1701
    %v1709 = vadd.s32 %v1641, 4294967216
    %v1710 = vlaneseq
    %v1711 = vshrl.u32 %v1710, 7
    %v1712 = vsub.s32 %v1709, %v1711
    %v1713 = vrot.slane %v1565, %v1712
    %vm1714 = vcmask 720512
    %v1715 = vsel %vm1714, %v1713, %v1708
    %v1716 = vadd.s32 %v1641, 4294967208
    %v1717 = vlaneseq
    %v1718 = vshrl.u32 %v1717, 7
    %v1719 = vsub.s32 %v1716, %v1718
    %v1720 = vrot.slane %v1567, %v1719
    %vm1721 = vcmask 786112
    %v1722 = vsel %vm1721, %v1720, %v1715
    %v1723 = vadd.s32 %v1641, 4294967200
    %v1724 = vlaneseq
    %v1725 = vshrl.u32 %v1724, 7
    %v1726 = vsub.s32 %v1723, %v1725
    %v1727 = vrot.slane %v1569, %v1726
    %vm1728 = vcmask 851712
    %v1729 = vsel %vm1728, %v1727, %v1722
    %v1730 = vadd.s32 %v1641, 4294967192
    %v1731 = vlaneseq
    %v1732 = vshrl.u32 %v1731, 7
    %v1733 = vsub.s32 %v1730, %v1732
    %v1734 = vrot.slane %v1571, %v1733
    %vm1735 = vcmask 917312
    %v1736 = vsel %vm1735, %v1734, %v1729
    %v1737 = vadd.s32 %v1641, 4294967184
    %v1738 = vlaneseq
    %v1739 = vshrl.u32 %v1738, 7
    %v1740 = vsub.s32 %v1737, %v1739
    %v1741 = vrot.slane %v1573, %v1740
    %vm1742 = vcmask 982912
    %v1743 = vsel %vm1742, %v1741, %v1736
    %v1744 = vadd.s32 %v1641, 4294967176
    %v1745 = vlaneseq
    %v1746 = vshrl.u32 %v1745, 7
    %v1747 = vsub.s32 %v1744, %v1746
    %v1748 = vrot.slane %v1575, %v1747
    %vm1749 = vcmask 1048512
    %v1750 = vsel %vm1749, %v1748, %v1743
    %v1751 = vlaneseq
    %v1752 = vshrl.u32 %v1751, 7
    %v1753 = vsub.s32 %v1641, %v1752
    %v1754 = vrot.slane %v1577, %v1753
    %v1755 = vlaneseq
    %v1756 = vshrl.u32 %v1755, 7
    %v1757 = vsub.s32 %v1646, %v1756
    %v1758 = vrot.slane %v1579, %v1757
    %v1759 = vsel %vm1651, %v1758, %v1754
    %v1760 = vlaneseq
    %v1761 = vshrl.u32 %v1760, 7
    %v1762 = vsub.s32 %v1653, %v1761
    %v1763 = vrot.slane %v1581, %v1762
    %v1764 = vsel %vm1658, %v1763, %v1759
    %v1765 = vlaneseq
    %v1766 = vshrl.u32 %v1765, 7
    %v1767 = vsub.s32 %v1660, %v1766
    %v1768 = vrot.slane %v1583, %v1767
    %v1769 = vsel %vm1665, %v1768, %v1764
    %v1770 = vlaneseq
    %v1771 = vshrl.u32 %v1770, 7
    %v1772 = vsub.s32 %v1667, %v1771
    %v1773 = vrot.slane %v1585, %v1772
    %v1774 = vsel %vm1672, %v1773, %v1769
    %v1775 = vlaneseq
    %v1776 = vshrl.u32 %v1775, 7
    %v1777 = vsub.s32 %v1674, %v1776
    %v1778 = vrot.slane %v1587, %v1777
    %v1779 = vsel %vm1679, %v1778, %v1774
    %v1780 = vlaneseq
    %v1781 = vshrl.u32 %v1780, 7
    %v1782 = vsub.s32 %v1681, %v1781
    %v1783 = vrot.slane %v1589, %v1782
    %v1784 = vsel %vm1686, %v1783, %v1779
    %v1785 = vlaneseq
    %v1786 = vshrl.u32 %v1785, 7
    %v1787 = vsub.s32 %v1688, %v1786
    %v1788 = vrot.slane %v1591, %v1787
    %v1789 = vsel %vm1693, %v1788, %v1784
    %v1790 = vlaneseq
    %v1791 = vshrl.u32 %v1790, 7
    %v1792 = vsub.s32 %v1695, %v1791
    %v1793 = vrot.slane %v1593, %v1792
    %v1794 = vsel %vm1700, %v1793, %v1789
    %v1795 = vlaneseq
    %v1796 = vshrl.u32 %v1795, 7
    %v1797 = vsub.s32 %v1702, %v1796
    %v1798 = vrot.slane %v1595, %v1797
    %v1799 = vsel %vm1707, %v1798, %v1794
    %v1800 = vlaneseq
    %v1801 = vshrl.u32 %v1800, 7
    %v1802 = vsub.s32 %v1709, %v1801
    %v1803 = vrot.slane %v1597, %v1802
    %v1804 = vsel %vm1714, %v1803, %v1799
    %v1805 = vlaneseq
    %v1806 = vshrl.u32 %v1805, 7
    %v1807 = vsub.s32 %v1716, %v1806
    %v1808 = vrot.slane %v1599, %v1807
    %v1809 = vsel %vm1721, %v1808, %v1804
    %v1810 = vlaneseq
    %v1811 = vshrl.u32 %v1810, 7
    %v1812 = vsub.s32 %v1723, %v1811
    %v1813 = vrot.slane %v1601, %v1812
    %v1814 = vsel %vm1728, %v1813, %v1809
    %v1815 = vlaneseq
    %v1816 = vshrl.u32 %v1815, 7
    %v1817 = vsub.s32 %v1730, %v1816
    %v1818 = vrot.slane %v1603, %v1817
    %v1819 = vsel %vm1735, %v1818, %v1814
    %v1820 = vlaneseq
    %v1821 = vshrl.u32 %v1820, 7
    %v1822 = vsub.s32 %v1737, %v1821
    %v1823 = vrot.slane %v1605, %v1822
    %v1824 = vsel %vm1742, %v1823, %v1819
    %v1825 = vlaneseq
    %v1826 = vshrl.u32 %v1825, 7
    %v1827 = vsub.s32 %v1744, %v1826
    %v1828 = vrot.slane %v1607, %v1827
    %v1829 = vsel %vm1749, %v1828, %v1824
    %vm1830 = vcmask 1041409
    %v1831 = vsel %vm1830, %v1829, %v1750
    %1833 = vst [vmem:[#allocation3] sm:$0x3] %v1831
    // Predicated region
    $region46: #{tpu_custom_call.1} parent=1 // pred_check
      _
    $region47: #{tpu_custom_call.1} parent=1 // pred_check_branch
      %1835 = sbr.rel (0) target = $region49
    $region48: #{tpu_custom_call.1} parent=1 // pred_region
      %s1837 = ssub.s32 32, 32
      %1838 = vsyncadd [#allocation4], %s1837
      %s1840 = sshll.u32 [#allocation3], 4
      %s1841 = int_to_ptr.vmem [resolvable:$true] %s1840
      %1843 = dma.vmem_to_hbm [thread:$0]  %s1841, 32, %s11, [#allocation4]
    $region49: #{tpu_custom_call.1} parent=1 // pred_fallthru
      _
    // Predicated region
    $region50: #{tpu_custom_call.1} parent=1 // pred_check
      _
    $region51: #{tpu_custom_call.1} parent=1 // pred_check_branch
      %1845 = sbr.rel (0) target = $region53
    $region52: #{tpu_custom_call.1} parent=1 // pred_region
      %1846 = dma.done [#allocation4], 32
    $region53: #{tpu_custom_call.1} parent=1 // pred_fallthru
      _
    %1847 = vsyncpa [#allocation4], 1

</llo_original>
